<compile_context>
chip_gen: v7x
topology: tpu7x:2x2x1
jax: 0.10.0
libtpu: 0.0.40
codegen_flags: <defaults>
</compile_context>

<pallas_src>
import numpy as np
import jax
import jax.numpy as jnp
from jax.experimental import pallas as pl
from jax.experimental.pallas import tpu as pltpu


def _make_sdpa_kernel(*, h, d_k, d_v, hb, ha, has_attw, softmax_axis, scale,
                      use_bf16):
    cdt = jnp.bfloat16 if use_bf16 else jnp.float32
    approx = use_bf16          # approx reciprocal only on the loose-tolerance path

    def kernel(*refs):
        if has_attw:
            (q_ref, k_ref, v_ref, bias_ref, attw_ref,
             wq_ref, bq_ref, wk_ref, bk_ref, wv_ref, bv_ref,
             wo_ref, bo_ref, ln_g_ref, ln_b_ref, out_ref) = refs
        else:
            (q_ref, k_ref, v_ref, bias_ref,
             wq_ref, bq_ref, wk_ref, bk_ref, wv_ref, bv_ref,
             wo_ref, bo_ref, ln_g_ref, ln_b_ref, out_ref) = refs
            attw_ref = None

        B, nq, d_model = q_ref.shape
        nk = k_ref.shape[1]

        # NOTE: these reshapes only regroup major (sublane) dims; they are
        # relayout-free when nq / nk are multiples of 8.
        q2_f32 = q_ref[...].reshape(B * nq, d_model)      # residual rows (f32)
        q2 = q2_f32.astype(cdt)                           # cast once per tile
        k2 = k_ref[...].reshape(B * nk, d_model)          # pre-cast in wrapper
        v2 = v_ref[...].reshape(B * nk, d_model)

        # All-heads projections: single wide matmuls (N = h*d_k / h*d_v) that
        # fill the MXU width; f32 accumulation; 1/sqrt(d_k) folded into Q.
        Qall = (jnp.dot(q2, wq_ref[...], preferred_element_type=jnp.float32)
                + bq_ref[...]) * scale
        Kall = jnp.dot(k2, wk_ref[...],
                       preferred_element_type=jnp.float32) + bk_ref[...]
        Vall = jnp.dot(v2, wv_ref[...],
                       preferred_element_type=jnp.float32) + bv_ref[...]

        Qall = Qall.astype(cdt).reshape(B, nq, h * d_k)
        Kall = Kall.astype(cdt).reshape(B, nk, h * d_k)
        Vall = Vall.astype(cdt).reshape(B, nk, h * d_v)

        bias4 = bias_ref[...]                              # (B, hb, nq, nk) bf16
        bias_shared = bias4[:, 0] if hb == 1 else None
        if has_attw:
            attw4 = attw_ref[...]                          # (B, ha, nq, nk)
            attw_shared = attw4[:, 0] if ha == 1 else None

        # Per-head attention core (the narrow per-head matmuls are inherent to
        # the math; only static lane slices of already-projected values here).
        ctx_heads = []
        for i in range(h):
            Qi = Qall[:, :, i * d_k:(i + 1) * d_k]
            Ki = Kall[:, :, i * d_k:(i + 1) * d_k]
            Vi = Vall[:, :, i * d_v:(i + 1) * d_v]
            s = jnp.einsum('bqd,bkd->bqk', Qi, Ki,
                           preferred_element_type=jnp.float32)   # (B, nq, nk)
            if has_attw:
                s = s * (attw_shared if attw_shared is not None else attw4[:, i])
            s = s + (bias_shared if bias_shared is not None else bias4[:, i])

            m = jnp.max(s, axis=softmax_axis, keepdims=True)
            e = jnp.exp(s - m)
            denom = jnp.sum(e, axis=softmax_axis, keepdims=True)
            inv = pl.reciprocal(denom, approx=approx)
            if softmax_axis == 2:
                # softmax over keys (torch dim=-1): defer normalization until
                # after the PV matmul -> divide the (nq, d_v) context instead
                # of the (nq, nk) score matrix.
                ctx = jnp.einsum('bqk,bkd->bqd', e.astype(cdt), Vi,
                                 preferred_element_type=jnp.float32)
                ctx = ctx * inv                             # (B, nq, 1) bcast
            else:
                # softmax over queries (torch dim=-2): per-key normalization
                # must happen before the PV matmul.
                p = (e * inv).astype(cdt)                   # (B, 1, nk) bcast
                ctx = jnp.einsum('bqk,bkd->bqd', p, Vi,
                                 preferred_element_type=jnp.float32)
            ctx_heads.append(ctx.astype(cdt))

        # Single output projection with contraction K = h*d_v (one MXU pass
        # instead of h accumulating K=d_v dots).
        ctx_all = jnp.concatenate(ctx_heads, axis=-1).reshape(B * nq, h * d_v)
        proj = jnp.dot(ctx_all, wo_ref[...], preferred_element_type=jnp.float32)

        x = q2_f32 + proj + bo_ref[...]                # residual + fc_o bias
        mean = jnp.mean(x, axis=-1, keepdims=True)
        var = jnp.mean((x - mean) ** 2, axis=-1, keepdims=True)
        y = (x - mean) * jax.lax.rsqrt(var + 1e-5)     # LayerNorm eps = 1e-5
        y = y * ln_g_ref[...] + ln_b_ref[...]
        out_ref[...] = y.reshape(B, nq, d_model)

    return kernel


def scaled_dot_product_attention(queries, keys, values, params,
                                 attention_mask=None, attention_weights=None,
                                 dim=-2, *, b_tile=None, use_bf16=True,
                                 vmem_budget_bytes=24 << 20):
    """Forward pass matching the PyTorch ScaledDotProductAttention module."""
    b_s, nq, d_model = queries.shape
    nk = keys.shape[1]
    h, d_k, d_v = params["h"], params["d_k"], params["d_v"]
    if d_v != d_model:
        raise ValueError("LayerNorm(d_v) is applied to d_model features; "
                         "the module only works when d_v == d_model.")

    if dim in (-1, 3):
        softmax_axis = 2          # over keys
    elif dim in (-2, 2):
        softmax_axis = 1          # over queries
    else:
        raise ValueError(f"unsupported softmax dim {dim}; expected -1 or -2")

    in_dt = jnp.bfloat16 if use_bf16 else jnp.float32
    itemsize = jnp.dtype(in_dt).itemsize

    # Additive mask bias; a 3-D mask is NOT broadcast over heads here (hb=1
    # block -> h x less mask DMA).  -1e30 ~ -inf, but NaN-free if a row is
    # fully masked (documented behavioral divergence from masked_fill(-inf)).
    if attention_mask is None:
        bias = jnp.zeros((b_s, 1, nq, nk), jnp.bfloat16)
    else:
        mk = attention_mask
        if mk.ndim == 3:
            mk = mk[:, None, :, :]
        bias = jnp.where(mk, 0.0, -1e30).astype(jnp.bfloat16)
    hb = bias.shape[1]

    has_attw = attention_weights is not None
    if has_attw:
        aw = attention_weights
        if aw.ndim == 3:
            aw = aw[:, None, :, :]
        aw = aw.astype(in_dt)          # bf16 in the fast path: half the DMA
        ha = aw.shape[1]
    else:
        aw, ha = None, 1

    # Wrapper-side pre-casting (halves weight and K/V HBM traffic in bf16 mode;
    # no in-kernel astype of weights/K/V).  queries stay f32 for the residual.
    wq = params["wq"].astype(in_dt)                 # (d_model, h*d_k)
    wk = params["wk"].astype(in_dt)
    wv = params["wv"].astype(in_dt)                 # (d_model, h*d_v)
    wo = params["wo"].astype(in_dt)                 # (h*d_v, d_model)
    bq = params["bq"].reshape(1, h * d_k)           # biases stay f32 (tiny)
    bk = params["bk"].reshape(1, h * d_k)
    bv = params["bv"].reshape(1, h * d_v)
    bo = params["bo"].reshape(1, d_model)
    ln_g = params["ln_g"].reshape(1, d_model)
    ln_b = params["ln_b"].reshape(1, d_model)
    k_in = keys.astype(in_dt)
    v_in = values.astype(in_dt)

    def est_bytes(bt):
        io = (bt * nq * d_model * 4                      # queries (f32)
              + 2 * bt * nk * d_model * itemsize         # keys, values
              + bt * hb * nq * nk * 2                    # mask bias (bf16)
              + (bt * ha * nq * nk * itemsize if has_attw else 0)
              + bt * nq * d_model * 4)                   # output (f32)
        wgt = (2 * d_model * h * d_k + d_model * h * d_v
               + h * d_v * d_model) * itemsize
        inter = (bt * (nq + 2 * nk) * h * max(d_k, d_v) * (4 + itemsize)
                 + 4 * bt * nq * nk * 4
                 + bt * nq * h * d_v * (4 + itemsize))
        return 2 * io + 2 * wgt + inter                  # 2x: double buffering

    if b_tile is None:
        divs = sorted((d for d in range(1, b_s + 1) if b_s % d == 0),
                      reverse=True)
        if b_s >= 2:
            # keep >= 2 batch tiles so both v7x TensorCores get work
            divs = [d for d in divs if b_s // d >= 2] or [1]
        b_tile = next((d for d in divs if est_bytes(d) <= vmem_budget_bytes),
                      divs[-1])
    if b_s % b_tile != 0:
        raise ValueError("b_s must be divisible by b_tile")

    # Footprint-driven scoped-VMEM limit, capped below v7x's 64 MiB physical.
    vmem_limit = int(min(max(est_bytes(b_tile) * 3 // 2, 32 << 20), 48 << 20))

    grid = (b_s // b_tile,)
    bmap3 = lambda b: (b, 0, 0)
    bmap4 = lambda b: (b, 0, 0, 0)

    def full_spec(arr):
        # constant index_map -> block never changes -> stays VMEM-resident
        return pl.BlockSpec(arr.shape, lambda b, _n=arr.ndim: (0,) * _n)

    in_specs = [
        pl.BlockSpec((b_tile, nq, d_model), bmap3),    # queries (+ residual)
        pl.BlockSpec((b_tile, nk, d_model), bmap3),    # keys
        pl.BlockSpec((b_tile, nk, d_model), bmap3),    # values
        pl.BlockSpec((b_tile, hb, nq, nk), bmap4),     # additive mask bias
    ]
    args = [queries, k_in, v_in, bias]
    if has_attw:
        in_specs.append(pl.BlockSpec((b_tile, ha, nq, nk), bmap4))
        args.append(aw)
    for w in (wq, bq, wk, bk, wv, bv, wo, bo, ln_g, ln_b):
        in_specs.append(full_spec(w))
        args.append(w)

    kernel = _make_sdpa_kernel(h=h, d_k=d_k, d_v=d_v, hb=hb, ha=ha,
                               has_attw=has_attw, softmax_axis=softmax_axis,
                               scale=float(1.0 / np.sqrt(d_k)),
                               use_bf16=use_bf16)

    # TODO(synk): for long sequences add flash-style nk tiling with online-
    # softmax state, and a lane-dense 2-D output slab when d_model < 128.
    return pl.pallas_call(
        kernel,
        out_shape=jax.ShapeDtypeStruct((b_s, nq, d_model), jnp.float32),
        grid=grid,
        in_specs=in_specs,
        out_specs=pl.BlockSpec((b_tile, nq, d_model), bmap3),
        compiler_params=pltpu.CompilerParams(
            dimension_semantics=("parallel",),
            vmem_limit_bytes=vmem_limit),
    )(*args)


def _reference(queries, keys, values, p, mask, attw, dim):
    # plain-JAX mirror of the torch forward, for verification only
    b_s, nq, _ = queries.shape
    nk = keys.shape[1]
    h, d_k, d_v = p["h"], p["d_k"], p["d_v"]
    q = (queries @ p["wq"] + p["bq"]).reshape(b_s, nq, h, d_k).transpose(0, 2, 1, 3)
    k = (keys @ p["wk"] + p["bk"]).reshape(b_s, nk, h, d_k).transpose(0, 2, 3, 1)
    v = (values @ p["wv"] + p["bv"]).reshape(b_s, nk, h, d_v).transpose(0, 2, 1, 3)
    att = jnp.matmul(q, k) / np.sqrt(d_k)
    if attw is not None:
        att = att * attw
    if mask is not None:
        if mask.ndim != att.ndim:
            mask = jnp.broadcast_to(mask[:, None, :, :], att.shape)
        att = jnp.where(mask, att, -jnp.inf)
    att = jax.nn.softmax(att, axis=dim)
    out = jnp.matmul(att, v).transpose(0, 2, 1, 3).reshape(b_s, nq, h * d_v)
    out = out @ p["wo"] + p["bo"]
    x = queries + out
    mean = x.mean(-1, keepdims=True)
    var = ((x - mean) ** 2).mean(-1, keepdims=True)
    return (x - mean) / jnp.sqrt(var + 1e-5) * p["ln_g"] + p["ln_b"]


def init_params(key, d_model, d_k, d_v, h):
    # nn.Linear: weight ~ N(0, 0.001), bias = 0 ; nn.LayerNorm: gamma=1, beta=0
    ks = jax.random.split(key, 4)
    return {
        "d_model": d_model, "d_k": d_k, "d_v": d_v, "h": h,
        "wq": jax.random.normal(ks[0], (d_model, h * d_k), jnp.float32) * 0.001,
        "bq": jnp.zeros((h * d_k,), jnp.float32),
        "wk": jax.random.normal(ks[1], (d_model, h * d_k), jnp.float32) * 0.001,
        "bk": jnp.zeros((h * d_k,), jnp.float32),
        "wv": jax.random.normal(ks[2], (d_model, h * d_v), jnp.float32) * 0.001,
        "bv": jnp.zeros((h * d_v,), jnp.float32),
        "wo": jax.random.normal(ks[3], (h * d_v, d_model), jnp.float32) * 0.001,
        "bo": jnp.zeros((d_model,), jnp.float32),
        "ln_g": jnp.ones((d_v,), jnp.float32),
        "ln_b": jnp.zeros((d_v,), jnp.float32),
    }


if __name__ == "__main__":
    # NOTE: the torch module only works when d_v == d_model (LayerNorm(d_v)
    # is applied to a (b_s, nq, d_model) tensor), so they are chosen equal.
    d_model, d_k, d_v, h = 32, 32, 32, 4
    b_s, nq, nk = 2, 8, 8

    key = jax.random.PRNGKey(0)
    kp, kq, kk, kv, kw = jax.random.split(key, 5)
    params = init_params(kp, d_model, d_k, d_v, h)

    queries = jax.random.normal(kq, (b_s, nq, d_model), jnp.float32)
    keys = jax.random.normal(kk, (b_s, nk, d_model), jnp.float32)
    values = jax.random.normal(kv, (b_s, nk, d_model), jnp.float32)

    # 3-D boolean mask (True == keep), chosen so no softmax slice is fully masked.
    qi = jnp.arange(nq)[:, None]
    ki = jnp.arange(nk)[None, :]
    attention_mask = jnp.broadcast_to(ki <= qi + 4, (b_s, nq, nk))
    attw = 1.0 + 0.1 * jax.random.normal(kw, (b_s, h, nq, nk), jnp.float32)

    # dropout is defined in __init__ but never applied in forward -> omitted.
    # f32 reference-accuracy path (use_bf16=False): both softmax dims, +/- attw.
    for dim, aw in ((-2, None), (-1, None), (-1, attw)):
        out = scaled_dot_product_attention(queries, keys, values, params,
                                           attention_mask, attention_weights=aw,
                                           dim=dim, use_bf16=False)
        out = jax.block_until_ready(out)
        ref = _reference(queries, keys, values, params, attention_mask, aw, dim)
        np.testing.assert_allclose(np.asarray(out), np.asarray(ref),
                                   rtol=1e-4, atol=1e-4)

    # Default bf16-MXU fast path (valid on v5e/v6e/v7x): looser tolerance.
    for dim, aw in ((-2, None), (-1, attw)):
        out = scaled_dot_product_attention(queries, keys, values, params,
                                           attention_mask, attention_weights=aw,
                                           dim=dim)
        out = jax.block_until_ready(out)
        ref = _reference(queries, keys, values, params, attention_mask, aw, dim)
        np.testing.assert_allclose(np.asarray(out), np.asarray(ref),
                                   rtol=2e-2, atol=2e-2)

    print("KERNEL_OK")
</pallas_src>

<mosaic_0001>
module attributes {stable_mosaic.version = 11 : i64} {
  func.func @kernel(%arg0: i32, %arg1: memref<1x8x32xf32, #tpu.memory_space<vmem>>, %arg2: memref<1x8x32xf32, #tpu.memory_space<vmem>>, %arg3: memref<1x8x32xf32, #tpu.memory_space<vmem>>, %arg4: memref<1x1x8x8xbf16, #tpu.memory_space<vmem>>, %arg5: memref<32x128xf32, #tpu.memory_space<vmem>>, %arg6: memref<1x128xf32, #tpu.memory_space<vmem>>, %arg7: memref<32x128xf32, #tpu.memory_space<vmem>>, %arg8: memref<1x128xf32, #tpu.memory_space<vmem>>, %arg9: memref<32x128xf32, #tpu.memory_space<vmem>>, %arg10: memref<1x128xf32, #tpu.memory_space<vmem>>, %arg11: memref<128x32xf32, #tpu.memory_space<vmem>>, %arg12: memref<1x32xf32, #tpu.memory_space<vmem>>, %arg13: memref<1x32xf32, #tpu.memory_space<vmem>>, %arg14: memref<1x32xf32, #tpu.memory_space<vmem>>, %arg15: memref<1x8x32xf32, #tpu.memory_space<vmem>>) attributes {dimension_semantics = [#tpu.dimension_semantics<parallel>], iteration_bounds = array<i64: 2>, scalar_prefetch = 0 : i64, scratch_operands = 0 : i64, tpu.core_type = #tpu.core_type<tc>, window_params = [{transform_indices = @transform_0, window_bounds = array<i64: 1, 8, 32>}, {transform_indices = @transform_1, window_bounds = array<i64: 1, 8, 32>}, {transform_indices = @transform_2, window_bounds = array<i64: 1, 8, 32>}, {transform_indices = @transform_3, window_bounds = array<i64: 1, 1, 8, 8>}, {pipeline_mode = #tpu.pipeline_mode<synchronous>, transform_indices = @transform_4, window_bounds = array<i64: 32, 128>}, {pipeline_mode = #tpu.pipeline_mode<synchronous>, transform_indices = @transform_5, window_bounds = array<i64: 1, 128>}, {pipeline_mode = #tpu.pipeline_mode<synchronous>, transform_indices = @transform_6, window_bounds = array<i64: 32, 128>}, {pipeline_mode = #tpu.pipeline_mode<synchronous>, transform_indices = @transform_7, window_bounds = array<i64: 1, 128>}, {pipeline_mode = #tpu.pipeline_mode<synchronous>, transform_indices = @transform_8, window_bounds = array<i64: 32, 128>}, {pipeline_mode = #tpu.pipeline_mode<synchronous>, transform_indices = @transform_9, window_bounds = array<i64: 1, 128>}, {pipeline_mode = #tpu.pipeline_mode<synchronous>, transform_indices = @transform_10, window_bounds = array<i64: 128, 32>}, {pipeline_mode = #tpu.pipeline_mode<synchronous>, transform_indices = @transform_11, window_bounds = array<i64: 1, 32>}, {pipeline_mode = #tpu.pipeline_mode<synchronous>, transform_indices = @transform_12, window_bounds = array<i64: 1, 32>}, {pipeline_mode = #tpu.pipeline_mode<synchronous>, transform_indices = @transform_13, window_bounds = array<i64: 1, 32>}, {transform_indices = @transform_14, window_bounds = array<i64: 1, 8, 32>}]} {
    %c0 = arith.constant 0 : index
    %c0_0 = arith.constant 0 : index
    %c0_1 = arith.constant 0 : index
    %0 = vector.load %arg1[%c0, %c0_0, %c0_1] : memref<1x8x32xf32, #tpu.memory_space<vmem>>, vector<1x8x32xf32>
    %1 = vector.shape_cast %0 : vector<1x8x32xf32> to vector<8x32xf32>
    %c0_2 = arith.constant 0 : index
    %c0_3 = arith.constant 0 : index
    %c0_4 = arith.constant 0 : index
    %2 = vector.load %arg2[%c0_2, %c0_3, %c0_4] : memref<1x8x32xf32, #tpu.memory_space<vmem>>, vector<1x8x32xf32>
    %3 = vector.shape_cast %2 : vector<1x8x32xf32> to vector<8x32xf32>
    %c0_5 = arith.constant 0 : index
    %c0_6 = arith.constant 0 : index
    %c0_7 = arith.constant 0 : index
    %4 = vector.load %arg3[%c0_5, %c0_6, %c0_7] : memref<1x8x32xf32, #tpu.memory_space<vmem>>, vector<1x8x32xf32>
    %5 = vector.shape_cast %4 : vector<1x8x32xf32> to vector<8x32xf32>
    %c0_8 = arith.constant 0 : index
    %c0_9 = arith.constant 0 : index
    %6 = vector.load %arg5[%c0_8, %c0_9] : memref<32x128xf32, #tpu.memory_space<vmem>>, vector<32x128xf32>
    %cst = arith.constant dense<0.000000e+00> : vector<8x128xf32>
    %7 = tpu.matmul %1, %6, %cst {dimension_numbers = #tpu.dot_dimension_numbers<[1], [0], [0], [1], [0, 0, 1, 1], [], []>} : vector<8x32xf32>, vector<32x128xf32>, vector<8x128xf32> -> vector<8x128xf32>
    %c0_10 = arith.constant 0 : index
    %c0_11 = arith.constant 0 : index
    %8 = vector.load %arg6[%c0_10, %c0_11] : memref<1x128xf32, #tpu.memory_space<vmem>>, vector<1x128xf32>
    %9 = vector.broadcast %8 : vector<1x128xf32> to vector<8x128xf32>
    %10 = arith.addf %7, %9 : vector<8x128xf32>
    %cst_12 = arith.constant 0.176776692 : f32
    %11 = vector.broadcast %cst_12 : f32 to vector<8x128xf32>
    %12 = arith.mulf %10, %11 : vector<8x128xf32>
    %c0_13 = arith.constant 0 : index
    %c0_14 = arith.constant 0 : index
    %13 = vector.load %arg7[%c0_13, %c0_14] : memref<32x128xf32, #tpu.memory_space<vmem>>, vector<32x128xf32>
    %cst_15 = arith.constant dense<0.000000e+00> : vector<8x128xf32>
    %14 = tpu.matmul %3, %13, %cst_15 {dimension_numbers = #tpu.dot_dimension_numbers<[1], [0], [0], [1], [0, 0, 1, 1], [], []>} : vector<8x32xf32>, vector<32x128xf32>, vector<8x128xf32> -> vector<8x128xf32>
    %c0_16 = arith.constant 0 : index
    %c0_17 = arith.constant 0 : index
    %15 = vector.load %arg8[%c0_16, %c0_17] : memref<1x128xf32, #tpu.memory_space<vmem>>, vector<1x128xf32>
    %16 = vector.broadcast %15 : vector<1x128xf32> to vector<8x128xf32>
    %17 = arith.addf %14, %16 : vector<8x128xf32>
    %c0_18 = arith.constant 0 : index
    %c0_19 = arith.constant 0 : index
    %18 = vector.load %arg9[%c0_18, %c0_19] : memref<32x128xf32, #tpu.memory_space<vmem>>, vector<32x128xf32>
    %cst_20 = arith.constant dense<0.000000e+00> : vector<8x128xf32>
    %19 = tpu.matmul %5, %18, %cst_20 {dimension_numbers = #tpu.dot_dimension_numbers<[1], [0], [0], [1], [0, 0, 1, 1], [], []>} : vector<8x32xf32>, vector<32x128xf32>, vector<8x128xf32> -> vector<8x128xf32>
    %c0_21 = arith.constant 0 : index
    %c0_22 = arith.constant 0 : index
    %20 = vector.load %arg10[%c0_21, %c0_22] : memref<1x128xf32, #tpu.memory_space<vmem>>, vector<1x128xf32>
    %21 = vector.broadcast %20 : vector<1x128xf32> to vector<8x128xf32>
    %22 = arith.addf %19, %21 : vector<8x128xf32>
    %23 = vector.shape_cast %12 : vector<8x128xf32> to vector<1x8x128xf32>
    %24 = vector.shape_cast %17 : vector<8x128xf32> to vector<1x8x128xf32>
    %25 = vector.shape_cast %22 : vector<8x128xf32> to vector<1x8x128xf32>
    %c0_23 = arith.constant 0 : index
    %c0_24 = arith.constant 0 : index
    %c0_25 = arith.constant 0 : index
    %c0_26 = arith.constant 0 : index
    %26 = vector.load %arg4[%c0_23, %c0_24, %c0_25, %c0_26] : memref<1x1x8x8xbf16, #tpu.memory_space<vmem>>, vector<1x1x8x8xbf16>
    %27 = vector.shape_cast %26 : vector<1x1x8x8xbf16> to vector<1x8x8xbf16>
    %28 = vector.extract_strided_slice %23 {offsets = [0, 0, 0], sizes = [1, 8, 32], strides = [1, 1, 1]} : vector<1x8x128xf32> to vector<1x8x32xf32>
    %29 = vector.extract_strided_slice %24 {offsets = [0, 0, 0], sizes = [1, 8, 32], strides = [1, 1, 1]} : vector<1x8x128xf32> to vector<1x8x32xf32>
    %30 = vector.extract_strided_slice %25 {offsets = [0, 0, 0], sizes = [1, 8, 32], strides = [1, 1, 1]} : vector<1x8x128xf32> to vector<1x8x32xf32>
    "tpu.trace_start"() <{level = 10 : i32, message = "bqd,bkd->bqk"}> : () -> ()
    %cst_27 = arith.constant dense<0.000000e+00> : vector<1x8x8xf32>
    %31 = tpu.matmul %28, %29, %cst_27 {dimension_numbers = #tpu.dot_dimension_numbers<[2], [2], [1], [1], [0, 0, 0, 1, 1, 1], [0], [0]>} : vector<1x8x32xf32>, vector<1x8x32xf32>, vector<1x8x8xf32> -> vector<1x8x8xf32>
    "tpu.trace_stop"() : () -> ()
    %32 = arith.extf %27 : vector<1x8x8xbf16> to vector<1x8x8xf32>
    %33 = arith.addf %31, %32 : vector<1x8x8xf32>
    %cst_28 = arith.constant dense<0xFF800000> : vector<1x8xf32>
    %34 = vector.multi_reduction <maximumf>, %33, %cst_28 [1] : vector<1x8x8xf32> to vector<1x8xf32>
    %35 = vector.shape_cast %34 : vector<1x8xf32> to vector<1x1x8xf32>
    %36 = vector.broadcast %35 : vector<1x1x8xf32> to vector<1x8x8xf32>
    %37 = arith.subf %33, %36 : vector<1x8x8xf32>
    %38 = math.exp %37 : vector<1x8x8xf32>
    %cst_29 = arith.constant dense<0.000000e+00> : vector<1x8xf32>
    %39 = vector.multi_reduction <add>, %38, %cst_29 [1] : vector<1x8x8xf32> to vector<1x8xf32>
    %40 = vector.shape_cast %39 : vector<1x8xf32> to vector<1x1x8xf32>
    %41 = tpu.reciprocal %40 : vector<1x1x8xf32> -> vector<1x1x8xf32>
    %42 = vector.broadcast %41 : vector<1x1x8xf32> to vector<1x8x8xf32>
    %43 = arith.mulf %38, %42 : vector<1x8x8xf32>
    "tpu.trace_start"() <{level = 10 : i32, message = "bqk,bkd->bqd"}> : () -> ()
    %cst_30 = arith.constant dense<0.000000e+00> : vector<1x8x32xf32>
    %44 = tpu.matmul %43, %30, %cst_30 {dimension_numbers = #tpu.dot_dimension_numbers<[2], [1], [1], [2], [0, 0, 0, 1, 1, 2], [0], [0]>} : vector<1x8x8xf32>, vector<1x8x32xf32>, vector<1x8x32xf32> -> vector<1x8x32xf32>
    "tpu.trace_stop"() : () -> ()
    %45 = vector.extract_strided_slice %23 {offsets = [0, 0, 32], sizes = [1, 8, 32], strides = [1, 1, 1]} : vector<1x8x128xf32> to vector<1x8x32xf32>
    %46 = vector.extract_strided_slice %24 {offsets = [0, 0, 32], sizes = [1, 8, 32], strides = [1, 1, 1]} : vector<1x8x128xf32> to vector<1x8x32xf32>
    %47 = vector.extract_strided_slice %25 {offsets = [0, 0, 32], sizes = [1, 8, 32], strides = [1, 1, 1]} : vector<1x8x128xf32> to vector<1x8x32xf32>
    "tpu.trace_start"() <{level = 10 : i32, message = "bqd,bkd->bqk"}> : () -> ()
    %cst_31 = arith.constant dense<0.000000e+00> : vector<1x8x8xf32>
    %48 = tpu.matmul %45, %46, %cst_31 {dimension_numbers = #tpu.dot_dimension_numbers<[2], [2], [1], [1], [0, 0, 0, 1, 1, 1], [0], [0]>} : vector<1x8x32xf32>, vector<1x8x32xf32>, vector<1x8x8xf32> -> vector<1x8x8xf32>
    "tpu.trace_stop"() : () -> ()
    %49 = arith.extf %27 : vector<1x8x8xbf16> to vector<1x8x8xf32>
    %50 = arith.addf %48, %49 : vector<1x8x8xf32>
    %cst_32 = arith.constant dense<0xFF800000> : vector<1x8xf32>
    %51 = vector.multi_reduction <maximumf>, %50, %cst_32 [1] : vector<1x8x8xf32> to vector<1x8xf32>
    %52 = vector.shape_cast %51 : vector<1x8xf32> to vector<1x1x8xf32>
    %53 = vector.broadcast %52 : vector<1x1x8xf32> to vector<1x8x8xf32>
    %54 = arith.subf %50, %53 : vector<1x8x8xf32>
    %55 = math.exp %54 : vector<1x8x8xf32>
    %cst_33 = arith.constant dense<0.000000e+00> : vector<1x8xf32>
    %56 = vector.multi_reduction <add>, %55, %cst_33 [1] : vector<1x8x8xf32> to vector<1x8xf32>
    %57 = vector.shape_cast %56 : vector<1x8xf32> to vector<1x1x8xf32>
    %58 = tpu.reciprocal %57 : vector<1x1x8xf32> -> vector<1x1x8xf32>
    %59 = vector.broadcast %58 : vector<1x1x8xf32> to vector<1x8x8xf32>
    %60 = arith.mulf %55, %59 : vector<1x8x8xf32>
    "tpu.trace_start"() <{level = 10 : i32, message = "bqk,bkd->bqd"}> : () -> ()
    %cst_34 = arith.constant dense<0.000000e+00> : vector<1x8x32xf32>
    %61 = tpu.matmul %60, %47, %cst_34 {dimension_numbers = #tpu.dot_dimension_numbers<[2], [1], [1], [2], [0, 0, 0, 1, 1, 2], [0], [0]>} : vector<1x8x8xf32>, vector<1x8x32xf32>, vector<1x8x32xf32> -> vector<1x8x32xf32>
    "tpu.trace_stop"() : () -> ()
    %62 = vector.extract_strided_slice %23 {offsets = [0, 0, 64], sizes = [1, 8, 32], strides = [1, 1, 1]} : vector<1x8x128xf32> to vector<1x8x32xf32>
    %63 = vector.extract_strided_slice %24 {offsets = [0, 0, 64], sizes = [1, 8, 32], strides = [1, 1, 1]} : vector<1x8x128xf32> to vector<1x8x32xf32>
    %64 = vector.extract_strided_slice %25 {offsets = [0, 0, 64], sizes = [1, 8, 32], strides = [1, 1, 1]} : vector<1x8x128xf32> to vector<1x8x32xf32>
    "tpu.trace_start"() <{level = 10 : i32, message = "bqd,bkd->bqk"}> : () -> ()
    %cst_35 = arith.constant dense<0.000000e+00> : vector<1x8x8xf32>
    %65 = tpu.matmul %62, %63, %cst_35 {dimension_numbers = #tpu.dot_dimension_numbers<[2], [2], [1], [1], [0, 0, 0, 1, 1, 1], [0], [0]>} : vector<1x8x32xf32>, vector<1x8x32xf32>, vector<1x8x8xf32> -> vector<1x8x8xf32>
    "tpu.trace_stop"() : () -> ()
    %66 = arith.extf %27 : vector<1x8x8xbf16> to vector<1x8x8xf32>
    %67 = arith.addf %65, %66 : vector<1x8x8xf32>
    %cst_36 = arith.constant dense<0xFF800000> : vector<1x8xf32>
    %68 = vector.multi_reduction <maximumf>, %67, %cst_36 [1] : vector<1x8x8xf32> to vector<1x8xf32>
    %69 = vector.shape_cast %68 : vector<1x8xf32> to vector<1x1x8xf32>
    %70 = vector.broadcast %69 : vector<1x1x8xf32> to vector<1x8x8xf32>
    %71 = arith.subf %67, %70 : vector<1x8x8xf32>
    %72 = math.exp %71 : vector<1x8x8xf32>
    %cst_37 = arith.constant dense<0.000000e+00> : vector<1x8xf32>
    %73 = vector.multi_reduction <add>, %72, %cst_37 [1] : vector<1x8x8xf32> to vector<1x8xf32>
    %74 = vector.shape_cast %73 : vector<1x8xf32> to vector<1x1x8xf32>
    %75 = tpu.reciprocal %74 : vector<1x1x8xf32> -> vector<1x1x8xf32>
    %76 = vector.broadcast %75 : vector<1x1x8xf32> to vector<1x8x8xf32>
    %77 = arith.mulf %72, %76 : vector<1x8x8xf32>
    "tpu.trace_start"() <{level = 10 : i32, message = "bqk,bkd->bqd"}> : () -> ()
    %cst_38 = arith.constant dense<0.000000e+00> : vector<1x8x32xf32>
    %78 = tpu.matmul %77, %64, %cst_38 {dimension_numbers = #tpu.dot_dimension_numbers<[2], [1], [1], [2], [0, 0, 0, 1, 1, 2], [0], [0]>} : vector<1x8x8xf32>, vector<1x8x32xf32>, vector<1x8x32xf32> -> vector<1x8x32xf32>
    "tpu.trace_stop"() : () -> ()
    %79 = vector.extract_strided_slice %23 {offsets = [0, 0, 96], sizes = [1, 8, 32], strides = [1, 1, 1]} : vector<1x8x128xf32> to vector<1x8x32xf32>
    %80 = vector.extract_strided_slice %24 {offsets = [0, 0, 96], sizes = [1, 8, 32], strides = [1, 1, 1]} : vector<1x8x128xf32> to vector<1x8x32xf32>
    %81 = vector.extract_strided_slice %25 {offsets = [0, 0, 96], sizes = [1, 8, 32], strides = [1, 1, 1]} : vector<1x8x128xf32> to vector<1x8x32xf32>
    "tpu.trace_start"() <{level = 10 : i32, message = "bqd,bkd->bqk"}> : () -> ()
    %cst_39 = arith.constant dense<0.000000e+00> : vector<1x8x8xf32>
    %82 = tpu.matmul %79, %80, %cst_39 {dimension_numbers = #tpu.dot_dimension_numbers<[2], [2], [1], [1], [0, 0, 0, 1, 1, 1], [0], [0]>} : vector<1x8x32xf32>, vector<1x8x32xf32>, vector<1x8x8xf32> -> vector<1x8x8xf32>
    "tpu.trace_stop"() : () -> ()
    %83 = arith.extf %27 : vector<1x8x8xbf16> to vector<1x8x8xf32>
    %84 = arith.addf %82, %83 : vector<1x8x8xf32>
    %cst_40 = arith.constant dense<0xFF800000> : vector<1x8xf32>
    %85 = vector.multi_reduction <maximumf>, %84, %cst_40 [1] : vector<1x8x8xf32> to vector<1x8xf32>
    %86 = vector.shape_cast %85 : vector<1x8xf32> to vector<1x1x8xf32>
    %87 = vector.broadcast %86 : vector<1x1x8xf32> to vector<1x8x8xf32>
    %88 = arith.subf %84, %87 : vector<1x8x8xf32>
    %89 = math.exp %88 : vector<1x8x8xf32>
    %cst_41 = arith.constant dense<0.000000e+00> : vector<1x8xf32>
    %90 = vector.multi_reduction <add>, %89, %cst_41 [1] : vector<1x8x8xf32> to vector<1x8xf32>
    %91 = vector.shape_cast %90 : vector<1x8xf32> to vector<1x1x8xf32>
    %92 = tpu.reciprocal %91 : vector<1x1x8xf32> -> vector<1x1x8xf32>
    %93 = vector.broadcast %92 : vector<1x1x8xf32> to vector<1x8x8xf32>
    %94 = arith.mulf %89, %93 : vector<1x8x8xf32>
    "tpu.trace_start"() <{level = 10 : i32, message = "bqk,bkd->bqd"}> : () -> ()
    %cst_42 = arith.constant dense<0.000000e+00> : vector<1x8x32xf32>
    %95 = tpu.matmul %94, %81, %cst_42 {dimension_numbers = #tpu.dot_dimension_numbers<[2], [1], [1], [2], [0, 0, 0, 1, 1, 2], [0], [0]>} : vector<1x8x8xf32>, vector<1x8x32xf32>, vector<1x8x32xf32> -> vector<1x8x32xf32>
    "tpu.trace_stop"() : () -> ()
    %96 = tpu.concatenate %44, %61, %78, %95 in 2 : vector<1x8x32xf32>, vector<1x8x32xf32>, vector<1x8x32xf32>, vector<1x8x32xf32> -> vector<1x8x128xf32>
    %97 = vector.shape_cast %96 : vector<1x8x128xf32> to vector<8x128xf32>
    %c0_43 = arith.constant 0 : index
    %c0_44 = arith.constant 0 : index
    %98 = vector.load %arg11[%c0_43, %c0_44] : memref<128x32xf32, #tpu.memory_space<vmem>>, vector<128x32xf32>
    %cst_45 = arith.constant dense<0.000000e+00> : vector<8x32xf32>
    %99 = tpu.matmul %97, %98, %cst_45 {dimension_numbers = #tpu.dot_dimension_numbers<[1], [0], [0], [1], [0, 0, 1, 1], [], []>} : vector<8x128xf32>, vector<128x32xf32>, vector<8x32xf32> -> vector<8x32xf32>
    %100 = arith.addf %1, %99 : vector<8x32xf32>
    %c0_46 = arith.constant 0 : index
    %c0_47 = arith.constant 0 : index
    %101 = vector.load %arg12[%c0_46, %c0_47] : memref<1x32xf32, #tpu.memory_space<vmem>>, vector<1x32xf32>
    %102 = vector.broadcast %101 : vector<1x32xf32> to vector<8x32xf32>
    %103 = arith.addf %100, %102 : vector<8x32xf32>
    %cst_48 = arith.constant dense<0.000000e+00> : vector<8xf32>
    %104 = vector.multi_reduction <add>, %103, %cst_48 [1] : vector<8x32xf32> to vector<8xf32>
    %105 = vector.shape_cast %104 : vector<8xf32> to vector<8x1xf32>
    %cst_49 = arith.constant 3.200000e+01 : f32
    %106 = vector.broadcast %cst_49 : f32 to vector<8x1xf32>
    %107 = arith.divf %105, %106 : vector<8x1xf32>
    %108 = vector.broadcast %107 : vector<8x1xf32> to vector<8x32xf32>
    %109 = arith.subf %103, %108 : vector<8x32xf32>
    %110 = arith.mulf %109, %109 : vector<8x32xf32>
    %cst_50 = arith.constant dense<0.000000e+00> : vector<8xf32>
    %111 = vector.multi_reduction <add>, %110, %cst_50 [1] : vector<8x32xf32> to vector<8xf32>
    %112 = vector.shape_cast %111 : vector<8xf32> to vector<8x1xf32>
    %cst_51 = arith.constant 3.200000e+01 : f32
    %113 = vector.broadcast %cst_51 : f32 to vector<8x1xf32>
    %114 = arith.divf %112, %113 : vector<8x1xf32>
    %115 = vector.broadcast %107 : vector<8x1xf32> to vector<8x32xf32>
    %116 = arith.subf %103, %115 : vector<8x32xf32>
    %cst_52 = arith.constant 9.99999974E-6 : f32
    %117 = vector.broadcast %cst_52 : f32 to vector<8x1xf32>
    %118 = arith.addf %114, %117 : vector<8x1xf32>
    %119 = math.rsqrt %118 : vector<8x1xf32>
    %120 = vector.broadcast %119 : vector<8x1xf32> to vector<8x32xf32>
    %121 = arith.mulf %116, %120 : vector<8x32xf32>
    %c0_53 = arith.constant 0 : index
    %c0_54 = arith.constant 0 : index
    %122 = vector.load %arg13[%c0_53, %c0_54] : memref<1x32xf32, #tpu.memory_space<vmem>>, vector<1x32xf32>
    %123 = vector.broadcast %122 : vector<1x32xf32> to vector<8x32xf32>
    %124 = arith.mulf %121, %123 : vector<8x32xf32>
    %c0_55 = arith.constant 0 : index
    %c0_56 = arith.constant 0 : index
    %125 = vector.load %arg14[%c0_55, %c0_56] : memref<1x32xf32, #tpu.memory_space<vmem>>, vector<1x32xf32>
    %126 = vector.broadcast %125 : vector<1x32xf32> to vector<8x32xf32>
    %127 = arith.addf %124, %126 : vector<8x32xf32>
    %128 = vector.shape_cast %127 : vector<8x32xf32> to vector<1x8x32xf32>
    %c0_57 = arith.constant 0 : index
    %c0_58 = arith.constant 0 : index
    %c0_59 = arith.constant 0 : index
    %129 = vector.load %arg15[%c0_57, %c0_58, %c0_59] : memref<1x8x32xf32, #tpu.memory_space<vmem>>, vector<1x8x32xf32>
    tpu.vector_store %arg15[%c0_57, %c0_58, %c0_59], %128 {strides = array<i32>} : memref<1x8x32xf32, #tpu.memory_space<vmem>>, vector<1x8x32xf32>,
    return
  }
  func.func @transform_0(%arg0: i32) -> (i32, i32, i32) {
    %c0_i32 = arith.constant 0 : i32
    %c0_i32_0 = arith.constant 0 : i32
    %c0_i32_1 = arith.constant 0 : i32
    return %arg0, %c0_i32, %c0_i32_0 : i32, i32, i32
  }
  func.func @transform_1(%arg0: i32) -> (i32, i32, i32) {
    %c0_i32 = arith.constant 0 : i32
    %c0_i32_0 = arith.constant 0 : i32
    %c0_i32_1 = arith.constant 0 : i32
    return %arg0, %c0_i32, %c0_i32_0 : i32, i32, i32
  }
  func.func @transform_2(%arg0: i32) -> (i32, i32, i32) {
    %c0_i32 = arith.constant 0 : i32
    %c0_i32_0 = arith.constant 0 : i32
    %c0_i32_1 = arith.constant 0 : i32
    return %arg0, %c0_i32, %c0_i32_0 : i32, i32, i32
  }
  func.func @transform_3(%arg0: i32) -> (i32, i32, i32, i32) {
    %c0_i32 = arith.constant 0 : i32
    %c0_i32_0 = arith.constant 0 : i32
    %c0_i32_1 = arith.constant 0 : i32
    %c0_i32_2 = arith.constant 0 : i32
    return %arg0, %c0_i32, %c0_i32_0, %c0_i32_1 : i32, i32, i32, i32
  }
  func.func @transform_4(%arg0: i32) -> (i32, i32) {
    %c0_i32 = arith.constant 0 : i32
    %c0_i32_0 = arith.constant 0 : i32
    %c0_i32_1 = arith.constant 0 : i32
    return %c0_i32, %c0_i32_0 : i32, i32
  }
  func.func @transform_5(%arg0: i32) -> (i32, i32) {
    %c0_i32 = arith.constant 0 : i32
    %c0_i32_0 = arith.constant 0 : i32
    %c0_i32_1 = arith.constant 0 : i32
    return %c0_i32, %c0_i32_0 : i32, i32
  }
  func.func @transform_6(%arg0: i32) -> (i32, i32) {
    %c0_i32 = arith.constant 0 : i32
    %c0_i32_0 = arith.constant 0 : i32
    %c0_i32_1 = arith.constant 0 : i32
    return %c0_i32, %c0_i32_0 : i32, i32
  }
  func.func @transform_7(%arg0: i32) -> (i32, i32) {
    %c0_i32 = arith.constant 0 : i32
    %c0_i32_0 = arith.constant 0 : i32
    %c0_i32_1 = arith.constant 0 : i32
    return %c0_i32, %c0_i32_0 : i32, i32
  }
  func.func @transform_8(%arg0: i32) -> (i32, i32) {
    %c0_i32 = arith.constant 0 : i32
    %c0_i32_0 = arith.constant 0 : i32
    %c0_i32_1 = arith.constant 0 : i32
    return %c0_i32, %c0_i32_0 : i32, i32
  }
  func.func @transform_9(%arg0: i32) -> (i32, i32) {
    %c0_i32 = arith.constant 0 : i32
    %c0_i32_0 = arith.constant 0 : i32
    %c0_i32_1 = arith.constant 0 : i32
    return %c0_i32, %c0_i32_0 : i32, i32
  }
  func.func @transform_10(%arg0: i32) -> (i32, i32) {
    %c0_i32 = arith.constant 0 : i32
    %c0_i32_0 = arith.constant 0 : i32
    %c0_i32_1 = arith.constant 0 : i32
    return %c0_i32, %c0_i32_0 : i32, i32
  }
  func.func @transform_11(%arg0: i32) -> (i32, i32) {
    %c0_i32 = arith.constant 0 : i32
    %c0_i32_0 = arith.constant 0 : i32
    %c0_i32_1 = arith.constant 0 : i32
    return %c0_i32, %c0_i32_0 : i32, i32
  }
  func.func @transform_12(%arg0: i32) -> (i32, i32) {
    %c0_i32 = arith.constant 0 : i32
    %c0_i32_0 = arith.constant 0 : i32
    %c0_i32_1 = arith.constant 0 : i32
    return %c0_i32, %c0_i32_0 : i32, i32
  }
  func.func @transform_13(%arg0: i32) -> (i32, i32) {
    %c0_i32 = arith.constant 0 : i32
    %c0_i32_0 = arith.constant 0 : i32
    %c0_i32_1 = arith.constant 0 : i32
    return %c0_i32, %c0_i32_0 : i32, i32
  }
  func.func @transform_14(%arg0: i32) -> (i32, i32, i32) {
    %c0_i32 = arith.constant 0 : i32
    %c0_i32_0 = arith.constant 0 : i32
    %c0_i32_1 = arith.constant 0 : i32
    return %arg0, %c0_i32, %c0_i32_0 : i32, i32, i32
  }
}

</mosaic_0001>

<llo_original>
// kernel: tpu_custom_call.1
$region0: #{tpu_custom_call.1}
  #allocation0 [shape = 'u32[]', space=smem, size = 0x4, offset = 0x4, fixed_abs, tag = 'smem constant byte address 0x4 - core index']
  #allocation1 [shape = 'u32[144,128]{1,0:T(1,128)}', space=vmem, size = 0x12000, scoped, tag = 'internal scratch']
  %s0 = inlined_call_operand.vmem [shape: f32[2,8,32], index: 0, kind: input, shape index: {}]
  %s1 = inlined_call_operand.vmem [shape: f32[2,8,32], index: 1, kind: input, shape index: {}]
  %s2 = inlined_call_operand.vmem [shape: f32[2,8,32], index: 2, kind: input, shape index: {}]
  %s3 = inlined_call_operand.vmem [shape: bf16[2,1,8,8], index: 3, kind: input, shape index: {}]
  %s4 = inlined_call_operand.vmem [shape: f32[32,128], index: 4, kind: input, shape index: {}]
  %s5 = inlined_call_operand.vmem [shape: f32[1,128], index: 5, kind: input, shape index: {}]
  %s6 = inlined_call_operand.vmem [shape: f32[32,128], index: 6, kind: input, shape index: {}]
  %s7 = inlined_call_operand.vmem [shape: f32[1,128], index: 7, kind: input, shape index: {}]
  %s8 = inlined_call_operand.vmem [shape: f32[32,128], index: 8, kind: input, shape index: {}]
  %s9 = inlined_call_operand.vmem [shape: f32[1,128], index: 9, kind: input, shape index: {}]
  %s10 = inlined_call_operand.vmem [shape: f32[128,32], index: 10, kind: input, shape index: {}]
  %s11 = inlined_call_operand.vmem [shape: f32[1,32], index: 11, kind: input, shape index: {}]
  %s12 = inlined_call_operand.vmem [shape: f32[1,32], index: 12, kind: input, shape index: {}]
  %s13 = inlined_call_operand.vmem [shape: f32[1,32], index: 13, kind: input, shape index: {}]
  %s14 = inlined_call_operand.hbm [shape: f32[2,8,32], index: 14, kind: output, shape index: {}]
  %s15 = sld [smem:[#allocation0]]
  $region89: #{tpu_custom_call.1} parent=0
    _
  %s17 = ssub.s32 1, %s15
  %s18 = scalar_select 0, %s17, %s15
  $region1: #{tpu_custom_call.1} parent=0
    #allocation2 [shape = 'u8[8192]{0}', space=vmem, size = 0x2000, scoped, tag = 'output window, operand 0']
    #allocation3 [shape = 's32[2]{0}', space=sflag, size = 0x8, scoped, tag = 'scoped memory for tpu_custom_call.1']
    %19 = vsyncpa [#allocation3], 0
    %s20 = scalar_lea.sflag [#allocation3], 1
    %21 = vsyncpa %s20, 0
    loop: start=0, step=1, limit=4
    $region2: #{tpu_custom_call.1} parent=1 // loop_pre_header
      _
    $region3: #{tpu_custom_call.1} parent=1 // loop_header
      %s23 = sphi 0, %s27
      %p24 = scmp.ge.s32.totalorder %s23, 4
      %s33 = sphi 0, %s35
      %s36 = sphi 0, %s33
      %s37 = sphi 0, %s36
      %s53 = sphi 0, %s37
      %s59 = sphi 0, %s61
      %s62 = sphi 0, %s59
      %s63 = sphi 0, %s62
      %s79 = sphi 0, %s63
      %s85 = sphi 0, %s87
      %s88 = sphi 0, %s85
      %s89 = sphi 0, %s88
      %s105 = sphi 0, %s89
      %s111 = sphi 0, %s113
      %s114 = sphi 0, %s111
      %s115 = sphi 0, %s114
      %s131 = sphi 0, %s115
      %s135 = sphi 0, %s135
      %s137 = sphi 0, %s135
      %s138 = sphi 0, %s137
      %s152 = sphi 0, %s138
      %s156 = sphi 0, %s156
      %s158 = sphi 0, %s156
      %s159 = sphi 0, %s158
      %s173 = sphi 0, %s159
      %s177 = sphi 0, %s177
      %s179 = sphi 0, %s177
      %s180 = sphi 0, %s179
      %s194 = sphi 0, %s180
      %s198 = sphi 0, %s198
      %s200 = sphi 0, %s198
      %s201 = sphi 0, %s200
      %s215 = sphi 0, %s201
      %s219 = sphi 0, %s219
      %s221 = sphi 0, %s219
      %s222 = sphi 0, %s221
      %s236 = sphi 0, %s222
      %s240 = sphi 0, %s240
      %s242 = sphi 0, %s240
      %s243 = sphi 0, %s242
      %s257 = sphi 0, %s243
      %s261 = sphi 0, %s261
      %s263 = sphi 0, %s261
      %s264 = sphi 0, %s263
      %s278 = sphi 0, %s264
      %s282 = sphi 0, %s282
      %s284 = sphi 0, %s282
      %s285 = sphi 0, %s284
      %s299 = sphi 0, %s285
      %s303 = sphi 0, %s303
      %s305 = sphi 0, %s303
      %s306 = sphi 0, %s305
      %s320 = sphi 0, %s306
      %s324 = sphi 0, %s324
      %s326 = sphi 0, %s324
      %s327 = sphi 0, %s326
      %s341 = sphi 0, %s327
      %s347 = sphi 0, %s349
      %s350 = sphi 0, %s347
      %s351 = sphi 0, %s350
      %s367 = sphi 0, %s351
    $region4: #{tpu_custom_call.1} parent=1 // loop_header_branch
      %26 = sbr.rel (%p24) target = $region8
    $region5: #{tpu_custom_call.1} parent=1 // loop_body
      %s28 = ssub.s32 %s23, 1
      %s29 = ssub.s32 %s23, 2
      %s30 = sadd.s32 %s23, 1
      %s31 = ssub.s32 %s23, %s30
      %p32 = scmp.eq.s32.totalorder %s31, 0
      %s34 = sadd.s32 %s33, 1
      %s35 = scalar_select %p32, %s33, %s34
      %p38 = pneg %p32
      %p39 = scmp.eq.s32.totalorder %s23, 1
      %p40 = por %p38, %p39
      %p41 = scmp.ne.s32.totalorder %s33, %s36
      %p42 = scmp.eq.s32.totalorder %s23, 0
      %p43 = por %p41, %p42
      %p44 = scmp.ne.s32.totalorder %s33, %s36
      %p45 = scmp.eq.s32.totalorder %s28, 1
      %p46 = por %p44, %p45
      %p47 = scmp.ne.s32.totalorder %s36, %s37
      %p48 = scmp.eq.s32.totalorder %s28, 0
      %p49 = por %p47, %p48
      %p50 = scmp.ne.s32.totalorder %s36, %s37
      %p51 = scmp.eq.s32.totalorder %s29, 1
      %p52 = por %p50, %p51
      %p54 = scmp.ne.s32.totalorder %s37, %s53
      %p55 = scmp.eq.s32.totalorder %s29, 0
      %p56 = por %p54, %p55
      %s57 = ssub.s32 %s23, %s30
      %p58 = scmp.eq.s32.totalorder %s57, 0
      %s60 = sadd.s32 %s59, 1
      %s61 = scalar_select %p58, %s59, %s60
      %p64 = pneg %p58
      %p65 = scmp.eq.s32.totalorder %s23, 1
      %p66 = por %p64, %p65
      %p67 = scmp.ne.s32.totalorder %s59, %s62
      %p68 = scmp.eq.s32.totalorder %s23, 0
      %p69 = por %p67, %p68
      %p70 = scmp.ne.s32.totalorder %s59, %s62
      %p71 = scmp.eq.s32.totalorder %s28, 1
      %p72 = por %p70, %p71
      %p73 = scmp.ne.s32.totalorder %s62, %s63
      %p74 = scmp.eq.s32.totalorder %s28, 0
      %p75 = por %p73, %p74
      %p76 = scmp.ne.s32.totalorder %s62, %s63
      %p77 = scmp.eq.s32.totalorder %s29, 1
      %p78 = por %p76, %p77
      %p80 = scmp.ne.s32.totalorder %s63, %s79
      %p81 = scmp.eq.s32.totalorder %s29, 0
      %p82 = por %p80, %p81
      %s83 = ssub.s32 %s23, %s30
      %p84 = scmp.eq.s32.totalorder %s83, 0
      %s86 = sadd.s32 %s85, 1
      %s87 = scalar_select %p84, %s85, %s86
      %p90 = pneg %p84
      %p91 = scmp.eq.s32.totalorder %s23, 1
      %p92 = por %p90, %p91
      %p93 = scmp.ne.s32.totalorder %s85, %s88
      %p94 = scmp.eq.s32.totalorder %s23, 0
      %p95 = por %p93, %p94
      %p96 = scmp.ne.s32.totalorder %s85, %s88
      %p97 = scmp.eq.s32.totalorder %s28, 1
      %p98 = por %p96, %p97
      %p99 = scmp.ne.s32.totalorder %s88, %s89
      %p100 = scmp.eq.s32.totalorder %s28, 0
      %p101 = por %p99, %p100
      %p102 = scmp.ne.s32.totalorder %s88, %s89
      %p103 = scmp.eq.s32.totalorder %s29, 1
      %p104 = por %p102, %p103
      %p106 = scmp.ne.s32.totalorder %s89, %s105
      %p107 = scmp.eq.s32.totalorder %s29, 0
      %p108 = por %p106, %p107
      %s109 = ssub.s32 %s23, %s30
      %p110 = scmp.eq.s32.totalorder %s109, 0
      %s112 = sadd.s32 %s111, 1
      %s113 = scalar_select %p110, %s111, %s112
      %p116 = pneg %p110
      %p117 = scmp.eq.s32.totalorder %s23, 1
      %p118 = por %p116, %p117
      %p119 = scmp.ne.s32.totalorder %s111, %s114
      %p120 = scmp.eq.s32.totalorder %s23, 0
      %p121 = por %p119, %p120
      %p122 = scmp.ne.s32.totalorder %s111, %s114
      %p123 = scmp.eq.s32.totalorder %s28, 1
      %p124 = por %p122, %p123
      %p125 = scmp.ne.s32.totalorder %s114, %s115
      %p126 = scmp.eq.s32.totalorder %s28, 0
      %p127 = por %p125, %p126
      %p128 = scmp.ne.s32.totalorder %s114, %s115
      %p129 = scmp.eq.s32.totalorder %s29, 1
      %p130 = por %p128, %p129
      %p132 = scmp.ne.s32.totalorder %s115, %s131
      %p133 = scmp.eq.s32.totalorder %s29, 0
      %p134 = por %p132, %p133
      %s136 = sadd.s32 %s135, 1
      %p139 = scmp.eq.s32.totalorder %s23, 1
      %p140 = scmp.ne.s32.totalorder %s135, %s137
      %p141 = scmp.eq.s32.totalorder %s23, 0
      %p142 = por %p140, %p141
      %p143 = scmp.ne.s32.totalorder %s135, %s137
      %p144 = scmp.eq.s32.totalorder %s28, 1
      %p145 = por %p143, %p144
      %p146 = scmp.ne.s32.totalorder %s137, %s138
      %p147 = scmp.eq.s32.totalorder %s28, 0
      %p148 = por %p146, %p147
      %p149 = scmp.ne.s32.totalorder %s137, %s138
      %p150 = scmp.eq.s32.totalorder %s29, 1
      %p151 = por %p149, %p150
      %p153 = scmp.ne.s32.totalorder %s138, %s152
      %p154 = scmp.eq.s32.totalorder %s29, 0
      %p155 = por %p153, %p154
      %s157 = sadd.s32 %s156, 1
      %p160 = scmp.eq.s32.totalorder %s23, 1
      %p161 = scmp.ne.s32.totalorder %s156, %s158
      %p162 = scmp.eq.s32.totalorder %s23, 0
      %p163 = por %p161, %p162
      %p164 = scmp.ne.s32.totalorder %s156, %s158
      %p165 = scmp.eq.s32.totalorder %s28, 1
      %p166 = por %p164, %p165
      %p167 = scmp.ne.s32.totalorder %s158, %s159
      %p168 = scmp.eq.s32.totalorder %s28, 0
      %p169 = por %p167, %p168
      %p170 = scmp.ne.s32.totalorder %s158, %s159
      %p171 = scmp.eq.s32.totalorder %s29, 1
      %p172 = por %p170, %p171
      %p174 = scmp.ne.s32.totalorder %s159, %s173
      %p175 = scmp.eq.s32.totalorder %s29, 0
      %p176 = por %p174, %p175
      %s178 = sadd.s32 %s177, 1
      %p181 = scmp.eq.s32.totalorder %s23, 1
      %p182 = scmp.ne.s32.totalorder %s177, %s179
      %p183 = scmp.eq.s32.totalorder %s23, 0
      %p184 = por %p182, %p183
      %p185 = scmp.ne.s32.totalorder %s177, %s179
      %p186 = scmp.eq.s32.totalorder %s28, 1
      %p187 = por %p185, %p186
      %p188 = scmp.ne.s32.totalorder %s179, %s180
      %p189 = scmp.eq.s32.totalorder %s28, 0
      %p190 = por %p188, %p189
      %p191 = scmp.ne.s32.totalorder %s179, %s180
      %p192 = scmp.eq.s32.totalorder %s29, 1
      %p193 = por %p191, %p192
      %p195 = scmp.ne.s32.totalorder %s180, %s194
      %p196 = scmp.eq.s32.totalorder %s29, 0
      %p197 = por %p195, %p196
      %s199 = sadd.s32 %s198, 1
      %p202 = scmp.eq.s32.totalorder %s23, 1
      %p203 = scmp.ne.s32.totalorder %s198, %s200
      %p204 = scmp.eq.s32.totalorder %s23, 0
      %p205 = por %p203, %p204
      %p206 = scmp.ne.s32.totalorder %s198, %s200
      %p207 = scmp.eq.s32.totalorder %s28, 1
      %p208 = por %p206, %p207
      %p209 = scmp.ne.s32.totalorder %s200, %s201
      %p210 = scmp.eq.s32.totalorder %s28, 0
      %p211 = por %p209, %p210
      %p212 = scmp.ne.s32.totalorder %s200, %s201
      %p213 = scmp.eq.s32.totalorder %s29, 1
      %p214 = por %p212, %p213
      %p216 = scmp.ne.s32.totalorder %s201, %s215
      %p217 = scmp.eq.s32.totalorder %s29, 0
      %p218 = por %p216, %p217
      %s220 = sadd.s32 %s219, 1
      %p223 = scmp.eq.s32.totalorder %s23, 1
      %p224 = scmp.ne.s32.totalorder %s219, %s221
      %p225 = scmp.eq.s32.totalorder %s23, 0
      %p226 = por %p224, %p225
      %p227 = scmp.ne.s32.totalorder %s219, %s221
      %p228 = scmp.eq.s32.totalorder %s28, 1
      %p229 = por %p227, %p228
      %p230 = scmp.ne.s32.totalorder %s221, %s222
      %p231 = scmp.eq.s32.totalorder %s28, 0
      %p232 = por %p230, %p231
      %p233 = scmp.ne.s32.totalorder %s221, %s222
      %p234 = scmp.eq.s32.totalorder %s29, 1
      %p235 = por %p233, %p234
      %p237 = scmp.ne.s32.totalorder %s222, %s236
      %p238 = scmp.eq.s32.totalorder %s29, 0
      %p239 = por %p237, %p238
      %s241 = sadd.s32 %s240, 1
      %p244 = scmp.eq.s32.totalorder %s23, 1
      %p245 = scmp.ne.s32.totalorder %s240, %s242
      %p246 = scmp.eq.s32.totalorder %s23, 0
      %p247 = por %p245, %p246
      %p248 = scmp.ne.s32.totalorder %s240, %s242
      %p249 = scmp.eq.s32.totalorder %s28, 1
      %p250 = por %p248, %p249
      %p251 = scmp.ne.s32.totalorder %s242, %s243
      %p252 = scmp.eq.s32.totalorder %s28, 0
      %p253 = por %p251, %p252
      %p254 = scmp.ne.s32.totalorder %s242, %s243
      %p255 = scmp.eq.s32.totalorder %s29, 1
      %p256 = por %p254, %p255
      %p258 = scmp.ne.s32.totalorder %s243, %s257
      %p259 = scmp.eq.s32.totalorder %s29, 0
      %p260 = por %p258, %p259
      %s262 = sadd.s32 %s261, 1
      %p265 = scmp.eq.s32.totalorder %s23, 1
      %p266 = scmp.ne.s32.totalorder %s261, %s263
      %p267 = scmp.eq.s32.totalorder %s23, 0
      %p268 = por %p266, %p267
      %p269 = scmp.ne.s32.totalorder %s261, %s263
      %p270 = scmp.eq.s32.totalorder %s28, 1
      %p271 = por %p269, %p270
      %p272 = scmp.ne.s32.totalorder %s263, %s264
      %p273 = scmp.eq.s32.totalorder %s28, 0
      %p274 = por %p272, %p273
      %p275 = scmp.ne.s32.totalorder %s263, %s264
      %p276 = scmp.eq.s32.totalorder %s29, 1
      %p277 = por %p275, %p276
      %p279 = scmp.ne.s32.totalorder %s264, %s278
      %p280 = scmp.eq.s32.totalorder %s29, 0
      %p281 = por %p279, %p280
      %s283 = sadd.s32 %s282, 1
      %p286 = scmp.eq.s32.totalorder %s23, 1
      %p287 = scmp.ne.s32.totalorder %s282, %s284
      %p288 = scmp.eq.s32.totalorder %s23, 0
      %p289 = por %p287, %p288
      %p290 = scmp.ne.s32.totalorder %s282, %s284
      %p291 = scmp.eq.s32.totalorder %s28, 1
      %p292 = por %p290, %p291
      %p293 = scmp.ne.s32.totalorder %s284, %s285
      %p294 = scmp.eq.s32.totalorder %s28, 0
      %p295 = por %p293, %p294
      %p296 = scmp.ne.s32.totalorder %s284, %s285
      %p297 = scmp.eq.s32.totalorder %s29, 1
      %p298 = por %p296, %p297
      %p300 = scmp.ne.s32.totalorder %s285, %s299
      %p301 = scmp.eq.s32.totalorder %s29, 0
      %p302 = por %p300, %p301
      %s304 = sadd.s32 %s303, 1
      %p307 = scmp.eq.s32.totalorder %s23, 1
      %p308 = scmp.ne.s32.totalorder %s303, %s305
      %p309 = scmp.eq.s32.totalorder %s23, 0
      %p310 = por %p308, %p309
      %p311 = scmp.ne.s32.totalorder %s303, %s305
      %p312 = scmp.eq.s32.totalorder %s28, 1
      %p313 = por %p311, %p312
      %p314 = scmp.ne.s32.totalorder %s305, %s306
      %p315 = scmp.eq.s32.totalorder %s28, 0
      %p316 = por %p314, %p315
      %p317 = scmp.ne.s32.totalorder %s305, %s306
      %p318 = scmp.eq.s32.totalorder %s29, 1
      %p319 = por %p317, %p318
      %p321 = scmp.ne.s32.totalorder %s306, %s320
      %p322 = scmp.eq.s32.totalorder %s29, 0
      %p323 = por %p321, %p322
      %s325 = sadd.s32 %s324, 1
      %p328 = scmp.eq.s32.totalorder %s23, 1
      %p329 = scmp.ne.s32.totalorder %s324, %s326
      %p330 = scmp.eq.s32.totalorder %s23, 0
      %p331 = por %p329, %p330
      %p332 = scmp.ne.s32.totalorder %s324, %s326
      %p333 = scmp.eq.s32.totalorder %s28, 1
      %p334 = por %p332, %p333
      %p335 = scmp.ne.s32.totalorder %s326, %s327
      %p336 = scmp.eq.s32.totalorder %s28, 0
      %p337 = por %p335, %p336
      %p338 = scmp.ne.s32.totalorder %s326, %s327
      %p339 = scmp.eq.s32.totalorder %s29, 1
      %p340 = por %p338, %p339
      %p342 = scmp.ne.s32.totalorder %s327, %s341
      %p343 = scmp.eq.s32.totalorder %s29, 0
      %p344 = por %p342, %p343
      %s345 = ssub.s32 %s23, %s30
      %p346 = scmp.eq.s32.totalorder %s345, 0
      %s348 = sadd.s32 %s347, 1
      %s349 = scalar_select %p346, %s347, %s348
      %p352 = pneg %p346
      %p353 = scmp.eq.s32.totalorder %s23, 1
      %p354 = por %p352, %p353
      %p355 = scmp.ne.s32.totalorder %s347, %s350
      %p356 = scmp.eq.s32.totalorder %s23, 0
      %p357 = por %p355, %p356
      %p358 = scmp.ne.s32.totalorder %s347, %s350
      %p359 = scmp.eq.s32.totalorder %s28, 1
      %p360 = por %p358, %p359
      %p361 = scmp.ne.s32.totalorder %s350, %s351
      %p362 = scmp.eq.s32.totalorder %s28, 0
      %p363 = por %p361, %p362
      %p364 = scmp.ne.s32.totalorder %s350, %s351
      %p365 = scmp.eq.s32.totalorder %s29, 1
      %p366 = por %p364, %p365
      %p368 = scmp.ne.s32.totalorder %s351, %s367
      %p369 = scmp.eq.s32.totalorder %s29, 0
      %p370 = por %p368, %p369
      %p371 = scmp.le.s32.totalorder 1, %s23
      %p372 = scmp.lt.s32.totalorder %s23, 3
      %p373 = pnand %p371, %p372
      %p374 = pneg %p373
      // Predicated region
      $region9: #{tpu_custom_call.1} parent=5 // pred_check
        _
      $region10: #{tpu_custom_call.1} parent=5 // pred_check_branch
        %376 = sbr.rel (%p373) target = $region12
      $region11: #{tpu_custom_call.1} parent=5 // pred_region
        %s377 = ssub.s32 %s23, 1
        // Predicated region
        $region13: #{tpu_custom_call.1} parent=11 // pred_check
          %p378 = pneg %p148
        $region14: #{tpu_custom_call.1} parent=11 // pred_check_branch
          %380 = sbr.rel (%p378) target = $region16
        $region15: #{tpu_custom_call.1} parent=11 // pred_region
          _
        $region16: #{tpu_custom_call.1} parent=11 // pred_fallthru
          _
        // Predicated region
        $region17: #{tpu_custom_call.1} parent=11 // pred_check
          %p381 = pneg %p169
        $region18: #{tpu_custom_call.1} parent=11 // pred_check_branch
          %383 = sbr.rel (%p381) target = $region20
        $region19: #{tpu_custom_call.1} parent=11 // pred_region
          _
        $region20: #{tpu_custom_call.1} parent=11 // pred_fallthru
          _
        // Predicated region
        $region21: #{tpu_custom_call.1} parent=11 // pred_check
          %p384 = pneg %p190
        $region22: #{tpu_custom_call.1} parent=11 // pred_check_branch
          %386 = sbr.rel (%p384) target = $region24
        $region23: #{tpu_custom_call.1} parent=11 // pred_region
          _
        $region24: #{tpu_custom_call.1} parent=11 // pred_fallthru
          _
        // Predicated region
        $region25: #{tpu_custom_call.1} parent=11 // pred_check
          %p387 = pneg %p211
        $region26: #{tpu_custom_call.1} parent=11 // pred_check_branch
          %389 = sbr.rel (%p387) target = $region28
        $region27: #{tpu_custom_call.1} parent=11 // pred_region
          _
        $region28: #{tpu_custom_call.1} parent=11 // pred_fallthru
          _
        // Predicated region
        $region29: #{tpu_custom_call.1} parent=11 // pred_check
          %p390 = pneg %p232
        $region30: #{tpu_custom_call.1} parent=11 // pred_check_branch
          %392 = sbr.rel (%p390) target = $region32
        $region31: #{tpu_custom_call.1} parent=11 // pred_region
          _
        $region32: #{tpu_custom_call.1} parent=11 // pred_fallthru
          _
        // Predicated region
        $region33: #{tpu_custom_call.1} parent=11 // pred_check
          %p393 = pneg %p253
        $region34: #{tpu_custom_call.1} parent=11 // pred_check_branch
          %395 = sbr.rel (%p393) target = $region36
        $region35: #{tpu_custom_call.1} parent=11 // pred_region
          _
        $region36: #{tpu_custom_call.1} parent=11 // pred_fallthru
          _
        // Predicated region
        $region37: #{tpu_custom_call.1} parent=11 // pred_check
          %p396 = pneg %p274
        $region38: #{tpu_custom_call.1} parent=11 // pred_check_branch
          %398 = sbr.rel (%p396) target = $region40
        $region39: #{tpu_custom_call.1} parent=11 // pred_region
          _
        $region40: #{tpu_custom_call.1} parent=11 // pred_fallthru
          _
        // Predicated region
        $region41: #{tpu_custom_call.1} parent=11 // pred_check
          %p399 = pneg %p295
        $region42: #{tpu_custom_call.1} parent=11 // pred_check_branch
          %401 = sbr.rel (%p399) target = $region44
        $region43: #{tpu_custom_call.1} parent=11 // pred_region
          _
        $region44: #{tpu_custom_call.1} parent=11 // pred_fallthru
          _
        // Predicated region
        $region45: #{tpu_custom_call.1} parent=11 // pred_check
          %p402 = pneg %p316
        $region46: #{tpu_custom_call.1} parent=11 // pred_check_branch
          %404 = sbr.rel (%p402) target = $region48
        $region47: #{tpu_custom_call.1} parent=11 // pred_region
          _
        $region48: #{tpu_custom_call.1} parent=11 // pred_fallthru
          _
        // Predicated region
        $region49: #{tpu_custom_call.1} parent=11 // pred_check
          %p405 = pneg %p337
        $region50: #{tpu_custom_call.1} parent=11 // pred_check_branch
          %407 = sbr.rel (%p405) target = $region52
        $region51: #{tpu_custom_call.1} parent=11 // pred_region
          _
        $region52: #{tpu_custom_call.1} parent=11 // pred_fallthru
          _
      $region12: #{tpu_custom_call.1} parent=5 // pred_fallthru
        _
      %p408 = scmp.lt.s32.totalorder %s23, 2
      // Predicated region
      $region53: #{tpu_custom_call.1} parent=5 // pred_check
        %p409 = pneg %p408
      $region54: #{tpu_custom_call.1} parent=5 // pred_check_branch
        %411 = sbr.rel (%p409) target = $region56
      $region55: #{tpu_custom_call.1} parent=5 // pred_region
        // Predicated region
        $region57: #{tpu_custom_call.1} parent=55 // pred_check
          %p412 = pneg %p43
        $region58: #{tpu_custom_call.1} parent=55 // pred_check_branch
          %414 = sbr.rel (%p412) target = $region60
        $region59: #{tpu_custom_call.1} parent=55 // pred_region
          %p415 = scmp.lt.s32.totalorder %s23, 1
          %s416 = scalar_select %p415, %s23, 1
          %s417 = smul.addr %s416, 8
          %s418 = scalar_lea.vmem %s0, %s417
        $region60: #{tpu_custom_call.1} parent=55 // pred_fallthru
          _
        // Predicated region
        $region61: #{tpu_custom_call.1} parent=55 // pred_check
          %p419 = pneg %p69
        $region62: #{tpu_custom_call.1} parent=55 // pred_check_branch
          %421 = sbr.rel (%p419) target = $region64
        $region63: #{tpu_custom_call.1} parent=55 // pred_region
          %p422 = scmp.lt.s32.totalorder %s23, 1
          %s423 = scalar_select %p422, %s23, 1
          %s424 = smul.addr %s423, 8
          %s425 = scalar_lea.vmem %s1, %s424
        $region64: #{tpu_custom_call.1} parent=55 // pred_fallthru
          _
        // Predicated region
        $region65: #{tpu_custom_call.1} parent=55 // pred_check
          %p426 = pneg %p95
        $region66: #{tpu_custom_call.1} parent=55 // pred_check_branch
          %428 = sbr.rel (%p426) target = $region68
        $region67: #{tpu_custom_call.1} parent=55 // pred_region
          %p429 = scmp.lt.s32.totalorder %s23, 1
          %s430 = scalar_select %p429, %s23, 1
          %s431 = smul.addr %s430, 8
          %s432 = scalar_lea.vmem %s2, %s431
        $region68: #{tpu_custom_call.1} parent=55 // pred_fallthru
          _
        // Predicated region
        $region69: #{tpu_custom_call.1} parent=55 // pred_check
          %p433 = pneg %p121
        $region70: #{tpu_custom_call.1} parent=55 // pred_check_branch
          %435 = sbr.rel (%p433) target = $region72
        $region71: #{tpu_custom_call.1} parent=55 // pred_region
          %p436 = scmp.lt.s32.totalorder %s23, 1
          %s437 = scalar_select %p436, %s23, 1
          %s438 = smul.addr %s437, 4
          %s439 = scalar_lea.vmem %s3, %s438
        $region72: #{tpu_custom_call.1} parent=55 // pred_fallthru
          _
      $region56: #{tpu_custom_call.1} parent=5 // pred_fallthru
        _
      %p440 = scmp.le.s32.totalorder 1, %s23
      %p441 = scmp.lt.s32.totalorder %s23, 3
      %p442 = pnand %p440, %p441
      %p443 = pneg %p442
      // Predicated region
      $region73: #{tpu_custom_call.1} parent=5 // pred_check
        _
      $region74: #{tpu_custom_call.1} parent=5 // pred_check_branch
        %445 = sbr.rel (%p442) target = $region76
      $region75: #{tpu_custom_call.1} parent=5 // pred_region
        %s446 = ssub.s32 %s23, 1
        %p447 = scmp.lt.s32.totalorder %s28, 1
        %s448 = scalar_select %p447, %s28, 1
        %s449 = smul.addr %s448, 8
        %s450 = scalar_lea.vmem %s0, %s449
        %p451 = pneg %p49
        %p452 = pneg %p46
        %p453 = scmp.lt.s32.totalorder %s28, 1
        %s454 = scalar_select %p453, %s28, 1
        %s455 = smul.addr %s454, 8
        %s456 = scalar_lea.vmem %s1, %s455
        %p457 = pneg %p75
        %p458 = pneg %p72
        %p459 = scmp.lt.s32.totalorder %s28, 1
        %s460 = scalar_select %p459, %s28, 1
        %s461 = smul.addr %s460, 8
        %s462 = scalar_lea.vmem %s2, %s461
        %p463 = pneg %p101
        %p464 = pneg %p98
        %p465 = scmp.lt.s32.totalorder %s28, 1
        %s466 = scalar_select %p465, %s28, 1
        %s467 = smul.addr %s466, 4
        %s468 = scalar_lea.vmem %s3, %s467
        %p469 = pneg %p127
        %p470 = pneg %p124
        %p471 = pneg %p148
        %p472 = pneg %p145
        %p473 = pneg %p169
        %p474 = pneg %p166
        %p475 = pneg %p190
        %p476 = pneg %p187
        %p477 = pneg %p211
        %p478 = pneg %p208
        %p479 = pneg %p232
        %p480 = pneg %p229
        %p481 = pneg %p253
        %p482 = pneg %p250
        %p483 = pneg %p274
        %p484 = pneg %p271
        %p485 = pneg %p295
        %p486 = pneg %p292
        %p487 = pneg %p316
        %p488 = pneg %p313
        %p489 = pneg %p337
        %p490 = pneg %p334
        %p491 = pneg %p363
        %p492 = pneg %p360
        %s493 = sand.u32 %s350, 1
        %s494 = scalar_lea.sflag [#allocation3], %s493
        %s495 = sand.u32 %s350, 1
        %s496 = smul.addr %s495, 8
        %s497 = scalar_lea.vmem [#allocation2], %s496
        %p498 = scmp.lt.s32.totalorder %s28, 1
        %s499 = scalar_select %p498, %s28, 1
        %s500 = smul.addr %s499, 8
        %s501 = scalar_lea.vmem %s0, %s500
        %p502 = scmp.lt.s32.totalorder %s28, 1
        %s503 = scalar_select %p502, %s28, 1
        %s504 = smul.addr %s503, 8
        %s505 = scalar_lea.vmem %s1, %s504
        %p506 = scmp.lt.s32.totalorder %s28, 1
        %s507 = scalar_select %p506, %s28, 1
        %s508 = smul.addr %s507, 8
        %s509 = scalar_lea.vmem %s2, %s508
        %p510 = scmp.lt.s32.totalorder %s28, 1
        %s511 = scalar_select %p510, %s28, 1
        %s512 = smul.addr %s511, 4
        %s513 = scalar_lea.vmem %s3, %s512
        %v514 = vld [vmem:[%s501] sm:$0xff]
        %v515 = vld [vmem:[%s505] sm:$0xff]
        %v516 = vld [vmem:[%s509] sm:$0xff]
        %v517 = vld [vmem:[%s4] sm:$0xff]
        %v518 = vld [vmem:[%s4 + $0x8] sm:$0xff]
        %v519 = vld [vmem:[%s4 + $0x10] sm:$0xff]
        %v520 = vld [vmem:[%s4 + $0x18] sm:$0xff]
        %v521 = vld [vmem:[%s5] sm:$0x1]
        %v523 = vlaneseq
        %v524 = vshrl.u32 %v523, 7
        %v525 = vsub.s32 0, %v524
        %v526 = vrot.slane %v521, %v525
        %vm528 = vcmask 261120
        %v530 = vsel %vm528, %v514, 0
        %532 = vmatprep.subr.mxu0 0.0
        %533 = vmatpush1.msra.mxu0 %v517
        %534 = vmatprep.subr.mxu0 0.0
        %535 = vmatpush1.msra.mxu0 %v518
        %536 = vmatprep.subr.mxu0 0.0
        %537 = vmatpush1.msra.mxu0 %v519
        %538 = vmatprep.subr.mxu0 0.0
        %539 = vmatpush1.msra.mxu0 %v520
        %540 = vmatprep.subr.mxu0 0.0
        %541 = vmatpush1.msra.mxu0 0.0
        %542 = vmatprep.subr.mxu0 0.0
        %543 = vmatpush1.msra.mxu0 0.0
        %544 = vmatprep.subr.mxu0 0.0
        %545 = vmatpush1.msra.mxu0 0.0
        %546 = vmatprep.subr.mxu0 0.0
        %547 = vmatpush1.msra.mxu0 0.0
        %548 = vmatprep.subr.mxu0 0.0
        %549 = vmatpush1.msra.mxu0 0.0
        %550 = vmatprep.subr.mxu0 0.0
        %551 = vmatpush1.msra.mxu0 0.0
        %552 = vmatprep.subr.mxu0 0.0
        %553 = vmatpush1.msra.mxu0 0.0
        %554 = vmatprep.subr.mxu0 0.0
        %555 = vmatpush1.msra.mxu0 0.0
        %556 = vmatprep.subr.mxu0 0.0
        %557 = vmatpush1.msra.mxu0 0.0
        %558 = vmatprep.subr.mxu0 0.0
        %559 = vmatpush1.msra.mxu0 0.0
        %560 = vmatprep.subr.mxu0 0.0
        %561 = vmatpush1.msra.mxu0 0.0
        %562 = vmatprep.subr.mxu0 0.0
        %563 = vmatpush1.msra.mxu0 0.0
        %564 = vmatprep.subr.mxu0 0.0
        %565 = vmatpush1.msra.mxu0 0.0
        %566 = vmatprep.subr.mxu0 0.0
        %567 = vmatpush1.msra.mxu0 0.0
        %568 = vmatprep.subr.mxu0 0.0
        %569 = vmatpush1.msra.mxu0 0.0
        %570 = vmatprep.subr.mxu0 0.0
        %571 = vmatpush1.msra.mxu0 0.0
        %572 = vmatprep.subr.mxu0 0.0
        %573 = vmatpush1.msra.mxu0 0.0
        %574 = vmatprep.subr.mxu0 0.0
        %575 = vmatpush1.msra.mxu0 0.0
        %576 = vmatprep.subr.mxu0 0.0
        %577 = vmatpush1.msra.mxu0 0.0
        %578 = vmatprep.subr.mxu0 0.0
        %579 = vmatpush1.msra.mxu0 0.0
        %580 = vmatprep.subr.mxu0 0.0
        %581 = vmatpush1.msra.mxu0 0.0
        %582 = vmatprep.subr.mxu0 0.0
        %583 = vmatpush1.msra.mxu0 0.0
        %584 = vmatprep.subr.mxu0 0.0
        %585 = vmatpush1.msra.mxu0 0.0
        %586 = vmatprep.subr.mxu0 0.0
        %587 = vmatpush1.msra.mxu0 0.0
        %588 = vmatprep.subr.mxu0 0.0
        %589 = vmatpush1.msra.mxu0 0.0
        %590 = vmatprep.subr.mxu0 0.0
        %591 = vmatpush1.msra.mxu0 0.0
        %592 = vmatprep.subr.mxu0 0.0
        %593 = vmatpush1.msra.mxu0 0.0
        %594 = vmatprep.subr.mxu0 0.0
        %595 = vmatpush1.msra.mxu0 0.0
        %596 = vmatprep.mubr.f32.mxu0 0.0
        %597 = vmatmul.mubr.f32.gmra.mrb[0].mxu0 %v530
        %v598 = vpop.f32.mrb[0].mxu0
        %v599 = vadd.f32 %v526, %v598
        %v600 = vpop.f32.mrb[0].mxu0
        %601 = vdwg.mxu0
        %v602 = vmul.f32 %v599, 0.17677669
        %v603 = vld [vmem:[%s6] sm:$0xff]
        %v604 = vld [vmem:[%s6 + $0x8] sm:$0xff]
        %v605 = vld [vmem:[%s6 + $0x10] sm:$0xff]
        %v606 = vld [vmem:[%s6 + $0x18] sm:$0xff]
        %v607 = vld [vmem:[%s7] sm:$0x1]
        %v609 = vlaneseq
        %v610 = vshrl.u32 %v609, 7
        %v611 = vsub.s32 0, %v610
        %v612 = vrot.slane %v607, %v611
        %v615 = vsel %vm528, %v515, 0
        %617 = vmatprep.subr.mxu0 0.0
        %618 = vmatpush1.msra.mxu0 %v603
        %619 = vmatprep.subr.mxu0 0.0
        %620 = vmatpush1.msra.mxu0 %v604
        %621 = vmatprep.subr.mxu0 0.0
        %622 = vmatpush1.msra.mxu0 %v605
        %623 = vmatprep.subr.mxu0 0.0
        %624 = vmatpush1.msra.mxu0 %v606
        %625 = vmatprep.subr.mxu0 0.0
        %626 = vmatpush1.msra.mxu0 0.0
        %627 = vmatprep.subr.mxu0 0.0
        %628 = vmatpush1.msra.mxu0 0.0
        %629 = vmatprep.subr.mxu0 0.0
        %630 = vmatpush1.msra.mxu0 0.0
        %631 = vmatprep.subr.mxu0 0.0
        %632 = vmatpush1.msra.mxu0 0.0
        %633 = vmatprep.subr.mxu0 0.0
        %634 = vmatpush1.msra.mxu0 0.0
        %635 = vmatprep.subr.mxu0 0.0
        %636 = vmatpush1.msra.mxu0 0.0
        %637 = vmatprep.subr.mxu0 0.0
        %638 = vmatpush1.msra.mxu0 0.0
        %639 = vmatprep.subr.mxu0 0.0
        %640 = vmatpush1.msra.mxu0 0.0
        %641 = vmatprep.subr.mxu0 0.0
        %642 = vmatpush1.msra.mxu0 0.0
        %643 = vmatprep.subr.mxu0 0.0
        %644 = vmatpush1.msra.mxu0 0.0
        %645 = vmatprep.subr.mxu0 0.0
        %646 = vmatpush1.msra.mxu0 0.0
        %647 = vmatprep.subr.mxu0 0.0
        %648 = vmatpush1.msra.mxu0 0.0
        %649 = vmatprep.subr.mxu0 0.0
        %650 = vmatpush1.msra.mxu0 0.0
        %651 = vmatprep.subr.mxu0 0.0
        %652 = vmatpush1.msra.mxu0 0.0
        %653 = vmatprep.subr.mxu0 0.0
        %654 = vmatpush1.msra.mxu0 0.0
        %655 = vmatprep.subr.mxu0 0.0
        %656 = vmatpush1.msra.mxu0 0.0
        %657 = vmatprep.subr.mxu0 0.0
        %658 = vmatpush1.msra.mxu0 0.0
        %659 = vmatprep.subr.mxu0 0.0
        %660 = vmatpush1.msra.mxu0 0.0
        %661 = vmatprep.subr.mxu0 0.0
        %662 = vmatpush1.msra.mxu0 0.0
        %663 = vmatprep.subr.mxu0 0.0
        %664 = vmatpush1.msra.mxu0 0.0
        %665 = vmatprep.subr.mxu0 0.0
        %666 = vmatpush1.msra.mxu0 0.0
        %667 = vmatprep.subr.mxu0 0.0
        %668 = vmatpush1.msra.mxu0 0.0
        %669 = vmatprep.subr.mxu0 0.0
        %670 = vmatpush1.msra.mxu0 0.0
        %671 = vmatprep.subr.mxu0 0.0
        %672 = vmatpush1.msra.mxu0 0.0
        %673 = vmatprep.subr.mxu0 0.0
        %674 = vmatpush1.msra.mxu0 0.0
        %675 = vmatprep.subr.mxu0 0.0
        %676 = vmatpush1.msra.mxu0 0.0
        %677 = vmatprep.subr.mxu0 0.0
        %678 = vmatpush1.msra.mxu0 0.0
        %679 = vmatprep.subr.mxu0 0.0
        %680 = vmatpush1.msra.mxu0 0.0
        %681 = vmatprep.mubr.f32.mxu0 0.0
        %682 = vmatmul.mubr.f32.gmra.mrb[0].mxu0 %v615
        %v683 = vpop.f32.mrb[0].mxu0
        %v684 = vadd.f32 %v612, %v683
        %v685 = vpop.f32.mrb[0].mxu0
        %686 = vdwg.mxu0
        %v687 = vld [vmem:[%s8] sm:$0xff]
        %v688 = vld [vmem:[%s8 + $0x8] sm:$0xff]
        %v689 = vld [vmem:[%s8 + $0x10] sm:$0xff]
        %v690 = vld [vmem:[%s8 + $0x18] sm:$0xff]
        %v691 = vld [vmem:[%s9] sm:$0x1]
        %v693 = vlaneseq
        %v694 = vshrl.u32 %v693, 7
        %v695 = vsub.s32 0, %v694
        %v696 = vrot.slane %v691, %v695
        %v699 = vsel %vm528, %v516, 0
        %701 = vmatprep.subr.mxu0 0.0
        %702 = vmatpush1.msra.mxu0 %v687
        %703 = vmatprep.subr.mxu0 0.0
        %704 = vmatpush1.msra.mxu0 %v688
        %705 = vmatprep.subr.mxu0 0.0
        %706 = vmatpush1.msra.mxu0 %v689
        %707 = vmatprep.subr.mxu0 0.0
        %708 = vmatpush1.msra.mxu0 %v690
        %709 = vmatprep.subr.mxu0 0.0
        %710 = vmatpush1.msra.mxu0 0.0
        %711 = vmatprep.subr.mxu0 0.0
        %712 = vmatpush1.msra.mxu0 0.0
        %713 = vmatprep.subr.mxu0 0.0
        %714 = vmatpush1.msra.mxu0 0.0
        %715 = vmatprep.subr.mxu0 0.0
        %716 = vmatpush1.msra.mxu0 0.0
        %717 = vmatprep.subr.mxu0 0.0
        %718 = vmatpush1.msra.mxu0 0.0
        %719 = vmatprep.subr.mxu0 0.0
        %720 = vmatpush1.msra.mxu0 0.0
        %721 = vmatprep.subr.mxu0 0.0
        %722 = vmatpush1.msra.mxu0 0.0
        %723 = vmatprep.subr.mxu0 0.0
        %724 = vmatpush1.msra.mxu0 0.0
        %725 = vmatprep.subr.mxu0 0.0
        %726 = vmatpush1.msra.mxu0 0.0
        %727 = vmatprep.subr.mxu0 0.0
        %728 = vmatpush1.msra.mxu0 0.0
        %729 = vmatprep.subr.mxu0 0.0
        %730 = vmatpush1.msra.mxu0 0.0
        %731 = vmatprep.subr.mxu0 0.0
        %732 = vmatpush1.msra.mxu0 0.0
        %733 = vmatprep.subr.mxu0 0.0
        %734 = vmatpush1.msra.mxu0 0.0
        %735 = vmatprep.subr.mxu0 0.0
        %736 = vmatpush1.msra.mxu0 0.0
        %737 = vmatprep.subr.mxu0 0.0
        %738 = vmatpush1.msra.mxu0 0.0
        %739 = vmatprep.subr.mxu0 0.0
        %740 = vmatpush1.msra.mxu0 0.0
        %741 = vmatprep.subr.mxu0 0.0
        %742 = vmatpush1.msra.mxu0 0.0
        %743 = vmatprep.subr.mxu0 0.0
        %744 = vmatpush1.msra.mxu0 0.0
        %745 = vmatprep.subr.mxu0 0.0
        %746 = vmatpush1.msra.mxu0 0.0
        %747 = vmatprep.subr.mxu0 0.0
        %748 = vmatpush1.msra.mxu0 0.0
        %749 = vmatprep.subr.mxu0 0.0
        %750 = vmatpush1.msra.mxu0 0.0
        %751 = vmatprep.subr.mxu0 0.0
        %752 = vmatpush1.msra.mxu0 0.0
        %753 = vmatprep.subr.mxu0 0.0
        %754 = vmatpush1.msra.mxu0 0.0
        %755 = vmatprep.subr.mxu0 0.0
        %756 = vmatpush1.msra.mxu0 0.0
        %757 = vmatprep.subr.mxu0 0.0
        %758 = vmatpush1.msra.mxu0 0.0
        %759 = vmatprep.subr.mxu0 0.0
        %760 = vmatpush1.msra.mxu0 0.0
        %761 = vmatprep.subr.mxu0 0.0
        %762 = vmatpush1.msra.mxu0 0.0
        %763 = vmatprep.subr.mxu0 0.0
        %764 = vmatpush1.msra.mxu0 0.0
        %765 = vmatprep.mubr.f32.mxu0 0.0
        %766 = vmatmul.mubr.f32.gmra.mrb[0].mxu0 %v699
        %v767 = vpop.f32.mrb[0].mxu0
        %v768 = vadd.f32 %v696, %v767
        %v769 = vpop.f32.mrb[0].mxu0
        %770 = vdwg.mxu0
        %v771 = vld [vmem:[%s513] sm:$0xf]
        %v772 = vunpack.c.l.bf16 %v771
        %v774 = vsel %vm528, %v602, 0
        %v777 = vsel %vm528, %v684, 0
        %779 = vmatprep.subr.mxu0 0.0
        %780 = vmatpush1.xpose.msra.mxu0 %v777
        %781 = vmatprep.subr.mxu0 0.0
        %782 = vmatpush1.xpose.msra.mxu0 0.0
        %783 = vmatprep.subr.mxu0 0.0
        %784 = vmatpush1.xpose.msra.mxu0 0.0
        %785 = vmatprep.subr.mxu0 0.0
        %786 = vmatpush1.xpose.msra.mxu0 0.0
        %787 = vmatprep.subr.mxu0 0.0
        %788 = vmatpush1.xpose.msra.mxu0 0.0
        %789 = vmatprep.subr.mxu0 0.0
        %790 = vmatpush1.xpose.msra.mxu0 0.0
        %791 = vmatprep.subr.mxu0 0.0
        %792 = vmatpush1.xpose.msra.mxu0 0.0
        %793 = vmatprep.subr.mxu0 0.0
        %794 = vmatpush1.xpose.msra.mxu0 0.0
        %795 = vmatprep.subr.mxu0 0.0
        %796 = vmatpush1.xpose.msra.mxu0 0.0
        %797 = vmatprep.subr.mxu0 0.0
        %798 = vmatpush1.xpose.msra.mxu0 0.0
        %799 = vmatprep.subr.mxu0 0.0
        %800 = vmatpush1.xpose.msra.mxu0 0.0
        %801 = vmatprep.subr.mxu0 0.0
        %802 = vmatpush1.xpose.msra.mxu0 0.0
        %803 = vmatprep.subr.mxu0 0.0
        %804 = vmatpush1.xpose.msra.mxu0 0.0
        %805 = vmatprep.subr.mxu0 0.0
        %806 = vmatpush1.xpose.msra.mxu0 0.0
        %807 = vmatprep.subr.mxu0 0.0
        %808 = vmatpush1.xpose.msra.mxu0 0.0
        %809 = vmatprep.subr.mxu0 0.0
        %810 = vmatpush1.xpose.msra.mxu0 0.0
        %811 = vmatprep.subr.mxu0 0.0
        %812 = vmatpush1.xpose.msra.mxu0 0.0
        %813 = vmatprep.subr.mxu0 0.0
        %814 = vmatpush1.xpose.msra.mxu0 0.0
        %815 = vmatprep.subr.mxu0 0.0
        %816 = vmatpush1.xpose.msra.mxu0 0.0
        %817 = vmatprep.subr.mxu0 0.0
        %818 = vmatpush1.xpose.msra.mxu0 0.0
        %819 = vmatprep.subr.mxu0 0.0
        %820 = vmatpush1.xpose.msra.mxu0 0.0
        %821 = vmatprep.subr.mxu0 0.0
        %822 = vmatpush1.xpose.msra.mxu0 0.0
        %823 = vmatprep.subr.mxu0 0.0
        %824 = vmatpush1.xpose.msra.mxu0 0.0
        %825 = vmatprep.subr.mxu0 0.0
        %826 = vmatpush1.xpose.msra.mxu0 0.0
        %827 = vmatprep.subr.mxu0 0.0
        %828 = vmatpush1.xpose.msra.mxu0 0.0
        %829 = vmatprep.subr.mxu0 0.0
        %830 = vmatpush1.xpose.msra.mxu0 0.0
        %831 = vmatprep.subr.mxu0 0.0
        %832 = vmatpush1.xpose.msra.mxu0 0.0
        %833 = vmatprep.subr.mxu0 0.0
        %834 = vmatpush1.xpose.msra.mxu0 0.0
        %835 = vmatprep.subr.mxu0 0.0
        %836 = vmatpush1.xpose.msra.mxu0 0.0
        %837 = vmatprep.subr.mxu0 0.0
        %838 = vmatpush1.xpose.msra.mxu0 0.0
        %839 = vmatprep.subr.mxu0 0.0
        %840 = vmatpush1.xpose.msra.mxu0 0.0
        %841 = vmatprep.subr.mxu0 0.0
        %842 = vmatpush1.xpose.msra.mxu0 0.0
        %843 = vmatprep.mubr.f32.mxu0 0.0
        %844 = vmatmul.mubr.f32.gmra.mrb[0].mxu0 %v774
        %v845 = vpop.f32.mrb[0].mxu0
        %v846 = vadd.f32 %v772, %v845
        %v847 = vpop.f32.mrb[0].mxu0
        %848 = vdwg.mxu0
        %vm849 = vcmask 64512
        %v850 = vsel %vm849, %v846, -inf
        %v851 = vrot.slane %v850, 4
        %v852 = vmax.f32 %v850, %v851
        %v853 = vrot.slane %v852, 2
        %v854 = vmax.f32 %v852, %v853
        %v855 = vrot.slane %v854, 1
        %v856 = vmax.f32 %v854, %v855
        %v857 = vsub.f32 %v846, %v856
        %v858 = vmul.f32 %v857, 1.442695
        %v859 = vpow.pop %v858
        %v860 = vsel %vm849, %v859, 0.0
        %v861 = vrot.slane %v860, 4
        %v862 = vadd.f32 %v860, %v861
        %v863 = vrot.slane %v862, 2
        %v864 = vadd.f32 %v862, %v863
        %v865 = vrot.slane %v864, 1
        %v866 = vadd.f32 %v864, %v865
        %v867 = vrcp.pop %v866
        %v868 = vmul.f32 %v859, %v867
        %v870 = vsel %vm849, %v868, 0
        %872 = vmatprep.subr.mxu0 0.0
        %873 = vmatpush1.msra.mxu0 %v768
        %874 = vmatprep.subr.mxu0 0.0
        %875 = vmatpush1.msra.mxu0 0.0
        %876 = vmatprep.subr.mxu0 0.0
        %877 = vmatpush1.msra.mxu0 0.0
        %878 = vmatprep.subr.mxu0 0.0
        %879 = vmatpush1.msra.mxu0 0.0
        %880 = vmatprep.subr.mxu0 0.0
        %881 = vmatpush1.msra.mxu0 0.0
        %882 = vmatprep.subr.mxu0 0.0
        %883 = vmatpush1.msra.mxu0 0.0
        %884 = vmatprep.subr.mxu0 0.0
        %885 = vmatpush1.msra.mxu0 0.0
        %886 = vmatprep.subr.mxu0 0.0
        %887 = vmatpush1.msra.mxu0 0.0
        %888 = vmatprep.subr.mxu0 0.0
        %889 = vmatpush1.msra.mxu0 0.0
        %890 = vmatprep.subr.mxu0 0.0
        %891 = vmatpush1.msra.mxu0 0.0
        %892 = vmatprep.subr.mxu0 0.0
        %893 = vmatpush1.msra.mxu0 0.0
        %894 = vmatprep.subr.mxu0 0.0
        %895 = vmatpush1.msra.mxu0 0.0
        %896 = vmatprep.subr.mxu0 0.0
        %897 = vmatpush1.msra.mxu0 0.0
        %898 = vmatprep.subr.mxu0 0.0
        %899 = vmatpush1.msra.mxu0 0.0
        %900 = vmatprep.subr.mxu0 0.0
        %901 = vmatpush1.msra.mxu0 0.0
        %902 = vmatprep.subr.mxu0 0.0
        %903 = vmatpush1.msra.mxu0 0.0
        %904 = vmatprep.subr.mxu0 0.0
        %905 = vmatpush1.msra.mxu0 0.0
        %906 = vmatprep.subr.mxu0 0.0
        %907 = vmatpush1.msra.mxu0 0.0
        %908 = vmatprep.subr.mxu0 0.0
        %909 = vmatpush1.msra.mxu0 0.0
        %910 = vmatprep.subr.mxu0 0.0
        %911 = vmatpush1.msra.mxu0 0.0
        %912 = vmatprep.subr.mxu0 0.0
        %913 = vmatpush1.msra.mxu0 0.0
        %914 = vmatprep.subr.mxu0 0.0
        %915 = vmatpush1.msra.mxu0 0.0
        %916 = vmatprep.subr.mxu0 0.0
        %917 = vmatpush1.msra.mxu0 0.0
        %918 = vmatprep.subr.mxu0 0.0
        %919 = vmatpush1.msra.mxu0 0.0
        %920 = vmatprep.subr.mxu0 0.0
        %921 = vmatpush1.msra.mxu0 0.0
        %922 = vmatprep.subr.mxu0 0.0
        %923 = vmatpush1.msra.mxu0 0.0
        %924 = vmatprep.subr.mxu0 0.0
        %925 = vmatpush1.msra.mxu0 0.0
        %926 = vmatprep.subr.mxu0 0.0
        %927 = vmatpush1.msra.mxu0 0.0
        %928 = vmatprep.subr.mxu0 0.0
        %929 = vmatpush1.msra.mxu0 0.0
        %930 = vmatprep.subr.mxu0 0.0
        %931 = vmatpush1.msra.mxu0 0.0
        %932 = vmatprep.subr.mxu0 0.0
        %933 = vmatpush1.msra.mxu0 0.0
        %934 = vmatprep.subr.mxu0 0.0
        %935 = vmatpush1.msra.mxu0 0.0
        %936 = vmatprep.mubr.f32.mxu0 0.0
        %937 = vmatmul.mubr.f32.gmra.mrb[0].mxu0 %v870
        %v938 = vpop.f32.mrb[0].mxu0
        %v939 = vadd.f32 0.0, %v938
        %v940 = vpop.f32.mrb[0].mxu0
        %941 = vdwg.mxu0
        %942 = vrot.lane.b32.xlu0 %v602, 96
        %v943 = vpop.permute.xlu0 %942
        %944 = vrot.lane.b32.xlu0 %v684, 96
        %v945 = vpop.permute.xlu0 %944
        %v946 = vsel %vm528, %v943, 0
        %v948 = vsel %vm528, %v945, 0
        %950 = vmatprep.subr.mxu0 0.0
        %951 = vmatpush1.xpose.msra.mxu0 %v948
        %952 = vmatprep.subr.mxu0 0.0
        %953 = vmatpush1.xpose.msra.mxu0 0.0
        %954 = vmatprep.subr.mxu0 0.0
        %955 = vmatpush1.xpose.msra.mxu0 0.0
        %956 = vmatprep.subr.mxu0 0.0
        %957 = vmatpush1.xpose.msra.mxu0 0.0
        %958 = vmatprep.subr.mxu0 0.0
        %959 = vmatpush1.xpose.msra.mxu0 0.0
        %960 = vmatprep.subr.mxu0 0.0
        %961 = vmatpush1.xpose.msra.mxu0 0.0
        %962 = vmatprep.subr.mxu0 0.0
        %963 = vmatpush1.xpose.msra.mxu0 0.0
        %964 = vmatprep.subr.mxu0 0.0
        %965 = vmatpush1.xpose.msra.mxu0 0.0
        %966 = vmatprep.subr.mxu0 0.0
        %967 = vmatpush1.xpose.msra.mxu0 0.0
        %968 = vmatprep.subr.mxu0 0.0
        %969 = vmatpush1.xpose.msra.mxu0 0.0
        %970 = vmatprep.subr.mxu0 0.0
        %971 = vmatpush1.xpose.msra.mxu0 0.0
        %972 = vmatprep.subr.mxu0 0.0
        %973 = vmatpush1.xpose.msra.mxu0 0.0
        %974 = vmatprep.subr.mxu0 0.0
        %975 = vmatpush1.xpose.msra.mxu0 0.0
        %976 = vmatprep.subr.mxu0 0.0
        %977 = vmatpush1.xpose.msra.mxu0 0.0
        %978 = vmatprep.subr.mxu0 0.0
        %979 = vmatpush1.xpose.msra.mxu0 0.0
        %980 = vmatprep.subr.mxu0 0.0
        %981 = vmatpush1.xpose.msra.mxu0 0.0
        %982 = vmatprep.subr.mxu0 0.0
        %983 = vmatpush1.xpose.msra.mxu0 0.0
        %984 = vmatprep.subr.mxu0 0.0
        %985 = vmatpush1.xpose.msra.mxu0 0.0
        %986 = vmatprep.subr.mxu0 0.0
        %987 = vmatpush1.xpose.msra.mxu0 0.0
        %988 = vmatprep.subr.mxu0 0.0
        %989 = vmatpush1.xpose.msra.mxu0 0.0
        %990 = vmatprep.subr.mxu0 0.0
        %991 = vmatpush1.xpose.msra.mxu0 0.0
        %992 = vmatprep.subr.mxu0 0.0
        %993 = vmatpush1.xpose.msra.mxu0 0.0
        %994 = vmatprep.subr.mxu0 0.0
        %995 = vmatpush1.xpose.msra.mxu0 0.0
        %996 = vmatprep.subr.mxu0 0.0
        %997 = vmatpush1.xpose.msra.mxu0 0.0
        %998 = vmatprep.subr.mxu0 0.0
        %999 = vmatpush1.xpose.msra.mxu0 0.0
        %1000 = vmatprep.subr.mxu0 0.0
        %1001 = vmatpush1.xpose.msra.mxu0 0.0
        %1002 = vmatprep.subr.mxu0 0.0
        %1003 = vmatpush1.xpose.msra.mxu0 0.0
        %1004 = vmatprep.subr.mxu0 0.0
        %1005 = vmatpush1.xpose.msra.mxu0 0.0
        %1006 = vmatprep.subr.mxu0 0.0
        %1007 = vmatpush1.xpose.msra.mxu0 0.0
        %1008 = vmatprep.subr.mxu0 0.0
        %1009 = vmatpush1.xpose.msra.mxu0 0.0
        %1010 = vmatprep.subr.mxu0 0.0
        %1011 = vmatpush1.xpose.msra.mxu0 0.0
        %1012 = vmatprep.subr.mxu0 0.0
        %1013 = vmatpush1.xpose.msra.mxu0 0.0
        %1014 = vmatprep.mubr.f32.mxu0 0.0
        %1015 = vmatmul.mubr.f32.gmra.mrb[0].mxu0 %v946
        %v1016 = vpop.f32.mrb[0].mxu0
        %v1017 = vadd.f32 %v772, %v1016
        %v1018 = vpop.f32.mrb[0].mxu0
        %1019 = vdwg.mxu0
        %v1020 = vsel %vm849, %v1017, -inf
        %v1021 = vrot.slane %v1020, 4
        %v1022 = vmax.f32 %v1020, %v1021
        %v1023 = vrot.slane %v1022, 2
        %v1024 = vmax.f32 %v1022, %v1023
        %v1025 = vrot.slane %v1024, 1
        %v1026 = vmax.f32 %v1024, %v1025
        %v1027 = vsub.f32 %v1017, %v1026
        %v1028 = vmul.f32 %v1027, 1.442695
        %v1029 = vpow.pop %v1028
        %v1030 = vsel %vm849, %v1029, 0.0
        %v1031 = vrot.slane %v1030, 4
        %v1032 = vadd.f32 %v1030, %v1031
        %v1033 = vrot.slane %v1032, 2
        %v1034 = vadd.f32 %v1032, %v1033
        %v1035 = vrot.slane %v1034, 1
        %v1036 = vadd.f32 %v1034, %v1035
        %v1037 = vrcp.pop %v1036
        %v1038 = vmul.f32 %v1029, %v1037
        %1040 = vrot.lane.b32.xlu0 %v768, 96
        %v1041 = vpop.permute.xlu0 %1040
        %v1044 = vsel %vm849, %v1038, 0
        %1046 = vmatprep.subr.mxu0 0.0
        %1047 = vmatpush1.msra.mxu0 %v1041
        %1048 = vmatprep.subr.mxu0 0.0
        %1049 = vmatpush1.msra.mxu0 0.0
        %1050 = vmatprep.subr.mxu0 0.0
        %1051 = vmatpush1.msra.mxu0 0.0
        %1052 = vmatprep.subr.mxu0 0.0
        %1053 = vmatpush1.msra.mxu0 0.0
        %1054 = vmatprep.subr.mxu0 0.0
        %1055 = vmatpush1.msra.mxu0 0.0
        %1056 = vmatprep.subr.mxu0 0.0
        %1057 = vmatpush1.msra.mxu0 0.0
        %1058 = vmatprep.subr.mxu0 0.0
        %1059 = vmatpush1.msra.mxu0 0.0
        %1060 = vmatprep.subr.mxu0 0.0
        %1061 = vmatpush1.msra.mxu0 0.0
        %1062 = vmatprep.subr.mxu0 0.0
        %1063 = vmatpush1.msra.mxu0 0.0
        %1064 = vmatprep.subr.mxu0 0.0
        %1065 = vmatpush1.msra.mxu0 0.0
        %1066 = vmatprep.subr.mxu0 0.0
        %1067 = vmatpush1.msra.mxu0 0.0
        %1068 = vmatprep.subr.mxu0 0.0
        %1069 = vmatpush1.msra.mxu0 0.0
        %1070 = vmatprep.subr.mxu0 0.0
        %1071 = vmatpush1.msra.mxu0 0.0
        %1072 = vmatprep.subr.mxu0 0.0
        %1073 = vmatpush1.msra.mxu0 0.0
        %1074 = vmatprep.subr.mxu0 0.0
        %1075 = vmatpush1.msra.mxu0 0.0
        %1076 = vmatprep.subr.mxu0 0.0
        %1077 = vmatpush1.msra.mxu0 0.0
        %1078 = vmatprep.subr.mxu0 0.0
        %1079 = vmatpush1.msra.mxu0 0.0
        %1080 = vmatprep.subr.mxu0 0.0
        %1081 = vmatpush1.msra.mxu0 0.0
        %1082 = vmatprep.subr.mxu0 0.0
        %1083 = vmatpush1.msra.mxu0 0.0
        %1084 = vmatprep.subr.mxu0 0.0
        %1085 = vmatpush1.msra.mxu0 0.0
        %1086 = vmatprep.subr.mxu0 0.0
        %1087 = vmatpush1.msra.mxu0 0.0
        %1088 = vmatprep.subr.mxu0 0.0
        %1089 = vmatpush1.msra.mxu0 0.0
        %1090 = vmatprep.subr.mxu0 0.0
        %1091 = vmatpush1.msra.mxu0 0.0
        %1092 = vmatprep.subr.mxu0 0.0
        %1093 = vmatpush1.msra.mxu0 0.0
        %1094 = vmatprep.subr.mxu0 0.0
        %1095 = vmatpush1.msra.mxu0 0.0
        %1096 = vmatprep.subr.mxu0 0.0
        %1097 = vmatpush1.msra.mxu0 0.0
        %1098 = vmatprep.subr.mxu0 0.0
        %1099 = vmatpush1.msra.mxu0 0.0
        %1100 = vmatprep.subr.mxu0 0.0
        %1101 = vmatpush1.msra.mxu0 0.0
        %1102 = vmatprep.subr.mxu0 0.0
        %1103 = vmatpush1.msra.mxu0 0.0
        %1104 = vmatprep.subr.mxu0 0.0
        %1105 = vmatpush1.msra.mxu0 0.0
        %1106 = vmatprep.subr.mxu0 0.0
        %1107 = vmatpush1.msra.mxu0 0.0
        %1108 = vmatprep.subr.mxu0 0.0
        %1109 = vmatpush1.msra.mxu0 0.0
        %1110 = vmatprep.mubr.f32.mxu0 0.0
        %1111 = vmatmul.mubr.f32.gmra.mrb[0].mxu0 %v1044
        %v1112 = vpop.f32.mrb[0].mxu0
        %v1113 = vadd.f32 0.0, %v1112
        %v1114 = vpop.f32.mrb[0].mxu0
        %1115 = vdwg.mxu0
        %1116 = vrot.lane.b32.xlu0 %v602, 64
        %v1117 = vpop.permute.xlu0 %1116
        %1118 = vrot.lane.b32.xlu0 %v684, 64
        %v1119 = vpop.permute.xlu0 %1118
        %v1120 = vsel %vm528, %v1117, 0
        %v1122 = vsel %vm528, %v1119, 0
        %1124 = vmatprep.subr.mxu0 0.0
        %1125 = vmatpush1.xpose.msra.mxu0 %v1122
        %1126 = vmatprep.subr.mxu0 0.0
        %1127 = vmatpush1.xpose.msra.mxu0 0.0
        %1128 = vmatprep.subr.mxu0 0.0
        %1129 = vmatpush1.xpose.msra.mxu0 0.0
        %1130 = vmatprep.subr.mxu0 0.0
        %1131 = vmatpush1.xpose.msra.mxu0 0.0
        %1132 = vmatprep.subr.mxu0 0.0
        %1133 = vmatpush1.xpose.msra.mxu0 0.0
        %1134 = vmatprep.subr.mxu0 0.0
        %1135 = vmatpush1.xpose.msra.mxu0 0.0
        %1136 = vmatprep.subr.mxu0 0.0
        %1137 = vmatpush1.xpose.msra.mxu0 0.0
        %1138 = vmatprep.subr.mxu0 0.0
        %1139 = vmatpush1.xpose.msra.mxu0 0.0
        %1140 = vmatprep.subr.mxu0 0.0
        %1141 = vmatpush1.xpose.msra.mxu0 0.0
        %1142 = vmatprep.subr.mxu0 0.0
        %1143 = vmatpush1.xpose.msra.mxu0 0.0
        %1144 = vmatprep.subr.mxu0 0.0
        %1145 = vmatpush1.xpose.msra.mxu0 0.0
        %1146 = vmatprep.subr.mxu0 0.0
        %1147 = vmatpush1.xpose.msra.mxu0 0.0
        %1148 = vmatprep.subr.mxu0 0.0
        %1149 = vmatpush1.xpose.msra.mxu0 0.0
        %1150 = vmatprep.subr.mxu0 0.0
        %1151 = vmatpush1.xpose.msra.mxu0 0.0
        %1152 = vmatprep.subr.mxu0 0.0
        %1153 = vmatpush1.xpose.msra.mxu0 0.0
        %1154 = vmatprep.subr.mxu0 0.0
        %1155 = vmatpush1.xpose.msra.mxu0 0.0
        %1156 = vmatprep.subr.mxu0 0.0
        %1157 = vmatpush1.xpose.msra.mxu0 0.0
        %1158 = vmatprep.subr.mxu0 0.0
        %1159 = vmatpush1.xpose.msra.mxu0 0.0
        %1160 = vmatprep.subr.mxu0 0.0
        %1161 = vmatpush1.xpose.msra.mxu0 0.0
        %1162 = vmatprep.subr.mxu0 0.0
        %1163 = vmatpush1.xpose.msra.mxu0 0.0
        %1164 = vmatprep.subr.mxu0 0.0
        %1165 = vmatpush1.xpose.msra.mxu0 0.0
        %1166 = vmatprep.subr.mxu0 0.0
        %1167 = vmatpush1.xpose.msra.mxu0 0.0
        %1168 = vmatprep.subr.mxu0 0.0
        %1169 = vmatpush1.xpose.msra.mxu0 0.0
        %1170 = vmatprep.subr.mxu0 0.0
        %1171 = vmatpush1.xpose.msra.mxu0 0.0
        %1172 = vmatprep.subr.mxu0 0.0
        %1173 = vmatpush1.xpose.msra.mxu0 0.0
        %1174 = vmatprep.subr.mxu0 0.0
        %1175 = vmatpush1.xpose.msra.mxu0 0.0
        %1176 = vmatprep.subr.mxu0 0.0
        %1177 = vmatpush1.xpose.msra.mxu0 0.0
        %1178 = vmatprep.subr.mxu0 0.0
        %1179 = vmatpush1.xpose.msra.mxu0 0.0
        %1180 = vmatprep.subr.mxu0 0.0
        %1181 = vmatpush1.xpose.msra.mxu0 0.0
        %1182 = vmatprep.subr.mxu0 0.0
        %1183 = vmatpush1.xpose.msra.mxu0 0.0
        %1184 = vmatprep.subr.mxu0 0.0
        %1185 = vmatpush1.xpose.msra.mxu0 0.0
        %1186 = vmatprep.subr.mxu0 0.0
        %1187 = vmatpush1.xpose.msra.mxu0 0.0
        %1188 = vmatprep.mubr.f32.mxu0 0.0
        %1189 = vmatmul.mubr.f32.gmra.mrb[0].mxu0 %v1120
        %v1190 = vpop.f32.mrb[0].mxu0
        %v1191 = vadd.f32 %v772, %v1190
        %v1192 = vpop.f32.mrb[0].mxu0
        %1193 = vdwg.mxu0
        %v1194 = vsel %vm849, %v1191, -inf
        %v1195 = vrot.slane %v1194, 4
        %v1196 = vmax.f32 %v1194, %v1195
        %v1197 = vrot.slane %v1196, 2
        %v1198 = vmax.f32 %v1196, %v1197
        %v1199 = vrot.slane %v1198, 1
        %v1200 = vmax.f32 %v1198, %v1199
        %v1201 = vsub.f32 %v1191, %v1200
        %v1202 = vmul.f32 %v1201, 1.442695
        %v1203 = vpow.pop %v1202
        %v1204 = vsel %vm849, %v1203, 0.0
        %v1205 = vrot.slane %v1204, 4
        %v1206 = vadd.f32 %v1204, %v1205
        %v1207 = vrot.slane %v1206, 2
        %v1208 = vadd.f32 %v1206, %v1207
        %v1209 = vrot.slane %v1208, 1
        %v1210 = vadd.f32 %v1208, %v1209
        %v1211 = vrcp.pop %v1210
        %v1212 = vmul.f32 %v1203, %v1211
        %1213 = vrot.lane.b32.xlu0 %v768, 64
        %v1214 = vpop.permute.xlu0 %1213
        %v1217 = vsel %vm849, %v1212, 0
        %1219 = vmatprep.subr.mxu0 0.0
        %1220 = vmatpush1.msra.mxu0 %v1214
        %1221 = vmatprep.subr.mxu0 0.0
        %1222 = vmatpush1.msra.mxu0 0.0
        %1223 = vmatprep.subr.mxu0 0.0
        %1224 = vmatpush1.msra.mxu0 0.0
        %1225 = vmatprep.subr.mxu0 0.0
        %1226 = vmatpush1.msra.mxu0 0.0
        %1227 = vmatprep.subr.mxu0 0.0
        %1228 = vmatpush1.msra.mxu0 0.0
        %1229 = vmatprep.subr.mxu0 0.0
        %1230 = vmatpush1.msra.mxu0 0.0
        %1231 = vmatprep.subr.mxu0 0.0
        %1232 = vmatpush1.msra.mxu0 0.0
        %1233 = vmatprep.subr.mxu0 0.0
        %1234 = vmatpush1.msra.mxu0 0.0
        %1235 = vmatprep.subr.mxu0 0.0
        %1236 = vmatpush1.msra.mxu0 0.0
        %1237 = vmatprep.subr.mxu0 0.0
        %1238 = vmatpush1.msra.mxu0 0.0
        %1239 = vmatprep.subr.mxu0 0.0
        %1240 = vmatpush1.msra.mxu0 0.0
        %1241 = vmatprep.subr.mxu0 0.0
        %1242 = vmatpush1.msra.mxu0 0.0
        %1243 = vmatprep.subr.mxu0 0.0
        %1244 = vmatpush1.msra.mxu0 0.0
        %1245 = vmatprep.subr.mxu0 0.0
        %1246 = vmatpush1.msra.mxu0 0.0
        %1247 = vmatprep.subr.mxu0 0.0
        %1248 = vmatpush1.msra.mxu0 0.0
        %1249 = vmatprep.subr.mxu0 0.0
        %1250 = vmatpush1.msra.mxu0 0.0
        %1251 = vmatprep.subr.mxu0 0.0
        %1252 = vmatpush1.msra.mxu0 0.0
        %1253 = vmatprep.subr.mxu0 0.0
        %1254 = vmatpush1.msra.mxu0 0.0
        %1255 = vmatprep.subr.mxu0 0.0
        %1256 = vmatpush1.msra.mxu0 0.0
        %1257 = vmatprep.subr.mxu0 0.0
        %1258 = vmatpush1.msra.mxu0 0.0
        %1259 = vmatprep.subr.mxu0 0.0
        %1260 = vmatpush1.msra.mxu0 0.0
        %1261 = vmatprep.subr.mxu0 0.0
        %1262 = vmatpush1.msra.mxu0 0.0
        %1263 = vmatprep.subr.mxu0 0.0
        %1264 = vmatpush1.msra.mxu0 0.0
        %1265 = vmatprep.subr.mxu0 0.0
        %1266 = vmatpush1.msra.mxu0 0.0
        %1267 = vmatprep.subr.mxu0 0.0
        %1268 = vmatpush1.msra.mxu0 0.0
        %1269 = vmatprep.subr.mxu0 0.0
        %1270 = vmatpush1.msra.mxu0 0.0
        %1271 = vmatprep.subr.mxu0 0.0
        %1272 = vmatpush1.msra.mxu0 0.0
        %1273 = vmatprep.subr.mxu0 0.0
        %1274 = vmatpush1.msra.mxu0 0.0
        %1275 = vmatprep.subr.mxu0 0.0
        %1276 = vmatpush1.msra.mxu0 0.0
        %1277 = vmatprep.subr.mxu0 0.0
        %1278 = vmatpush1.msra.mxu0 0.0
        %1279 = vmatprep.subr.mxu0 0.0
        %1280 = vmatpush1.msra.mxu0 0.0
        %1281 = vmatprep.subr.mxu0 0.0
        %1282 = vmatpush1.msra.mxu0 0.0
        %1283 = vmatprep.mubr.f32.mxu0 0.0
        %1284 = vmatmul.mubr.f32.gmra.mrb[0].mxu0 %v1217
        %v1285 = vpop.f32.mrb[0].mxu0
        %v1286 = vadd.f32 0.0, %v1285
        %v1287 = vpop.f32.mrb[0].mxu0
        %1288 = vdwg.mxu0
        %1289 = vrot.lane.b32.xlu0 %v602, 32
        %v1290 = vpop.permute.xlu0 %1289
        %1291 = vrot.lane.b32.xlu0 %v684, 32
        %v1292 = vpop.permute.xlu0 %1291
        %v1293 = vsel %vm528, %v1290, 0
        %v1295 = vsel %vm528, %v1292, 0
        %1297 = vmatprep.subr.mxu0 0.0
        %1298 = vmatpush1.xpose.msra.mxu0 %v1295
        %1299 = vmatprep.subr.mxu0 0.0
        %1300 = vmatpush1.xpose.msra.mxu0 0.0
        %1301 = vmatprep.subr.mxu0 0.0
        %1302 = vmatpush1.xpose.msra.mxu0 0.0
        %1303 = vmatprep.subr.mxu0 0.0
        %1304 = vmatpush1.xpose.msra.mxu0 0.0
        %1305 = vmatprep.subr.mxu0 0.0
        %1306 = vmatpush1.xpose.msra.mxu0 0.0
        %1307 = vmatprep.subr.mxu0 0.0
        %1308 = vmatpush1.xpose.msra.mxu0 0.0
        %1309 = vmatprep.subr.mxu0 0.0
        %1310 = vmatpush1.xpose.msra.mxu0 0.0
        %1311 = vmatprep.subr.mxu0 0.0
        %1312 = vmatpush1.xpose.msra.mxu0 0.0
        %1313 = vmatprep.subr.mxu0 0.0
        %1314 = vmatpush1.xpose.msra.mxu0 0.0
        %1315 = vmatprep.subr.mxu0 0.0
        %1316 = vmatpush1.xpose.msra.mxu0 0.0
        %1317 = vmatprep.subr.mxu0 0.0
        %1318 = vmatpush1.xpose.msra.mxu0 0.0
        %1319 = vmatprep.subr.mxu0 0.0
        %1320 = vmatpush1.xpose.msra.mxu0 0.0
        %1321 = vmatprep.subr.mxu0 0.0
        %1322 = vmatpush1.xpose.msra.mxu0 0.0
        %1323 = vmatprep.subr.mxu0 0.0
        %1324 = vmatpush1.xpose.msra.mxu0 0.0
        %1325 = vmatprep.subr.mxu0 0.0
        %1326 = vmatpush1.xpose.msra.mxu0 0.0
        %1327 = vmatprep.subr.mxu0 0.0
        %1328 = vmatpush1.xpose.msra.mxu0 0.0
        %1329 = vmatprep.subr.mxu0 0.0
        %1330 = vmatpush1.xpose.msra.mxu0 0.0
        %1331 = vmatprep.subr.mxu0 0.0
        %1332 = vmatpush1.xpose.msra.mxu0 0.0
        %1333 = vmatprep.subr.mxu0 0.0
        %1334 = vmatpush1.xpose.msra.mxu0 0.0
        %1335 = vmatprep.subr.mxu0 0.0
        %1336 = vmatpush1.xpose.msra.mxu0 0.0
        %1337 = vmatprep.subr.mxu0 0.0
        %1338 = vmatpush1.xpose.msra.mxu0 0.0
        %1339 = vmatprep.subr.mxu0 0.0
        %1340 = vmatpush1.xpose.msra.mxu0 0.0
        %1341 = vmatprep.subr.mxu0 0.0
        %1342 = vmatpush1.xpose.msra.mxu0 0.0
        %1343 = vmatprep.subr.mxu0 0.0
        %1344 = vmatpush1.xpose.msra.mxu0 0.0
        %1345 = vmatprep.subr.mxu0 0.0
        %1346 = vmatpush1.xpose.msra.mxu0 0.0
        %1347 = vmatprep.subr.mxu0 0.0
        %1348 = vmatpush1.xpose.msra.mxu0 0.0
        %1349 = vmatprep.subr.mxu0 0.0
        %1350 = vmatpush1.xpose.msra.mxu0 0.0
        %1351 = vmatprep.subr.mxu0 0.0
        %1352 = vmatpush1.xpose.msra.mxu0 0.0
        %1353 = vmatprep.subr.mxu0 0.0
        %1354 = vmatpush1.xpose.msra.mxu0 0.0
        %1355 = vmatprep.subr.mxu0 0.0
        %1356 = vmatpush1.xpose.msra.mxu0 0.0
        %1357 = vmatprep.subr.mxu0 0.0
        %1358 = vmatpush1.xpose.msra.mxu0 0.0
        %1359 = vmatprep.subr.mxu0 0.0
        %1360 = vmatpush1.xpose.msra.mxu0 0.0
        %1361 = vmatprep.mubr.f32.mxu0 0.0
        %1362 = vmatmul.mubr.f32.gmra.mrb[0].mxu0 %v1293
        %v1363 = vpop.f32.mrb[0].mxu0
        %v1364 = vadd.f32 %v772, %v1363
        %v1365 = vpop.f32.mrb[0].mxu0
        %1366 = vdwg.mxu0
        %v1367 = vsel %vm849, %v1364, -inf
        %v1368 = vrot.slane %v1367, 4
        %v1369 = vmax.f32 %v1367, %v1368
        %v1370 = vrot.slane %v1369, 2
        %v1371 = vmax.f32 %v1369, %v1370
        %v1372 = vrot.slane %v1371, 1
        %v1373 = vmax.f32 %v1371, %v1372
        %v1374 = vsub.f32 %v1364, %v1373
        %v1375 = vmul.f32 %v1374, 1.442695
        %v1376 = vpow.pop %v1375
        %v1377 = vsel %vm849, %v1376, 0.0
        %v1378 = vrot.slane %v1377, 4
        %v1379 = vadd.f32 %v1377, %v1378
        %v1380 = vrot.slane %v1379, 2
        %v1381 = vadd.f32 %v1379, %v1380
        %v1382 = vrot.slane %v1381, 1
        %v1383 = vadd.f32 %v1381, %v1382
        %v1384 = vrcp.pop %v1383
        %v1385 = vmul.f32 %v1376, %v1384
        %1386 = vrot.lane.b32.xlu0 %v768, 32
        %v1387 = vpop.permute.xlu0 %1386
        %v1390 = vsel %vm849, %v1385, 0
        %1392 = vmatprep.subr.mxu0 0.0
        %1393 = vmatpush1.msra.mxu0 %v1387
        %1394 = vmatprep.subr.mxu0 0.0
        %1395 = vmatpush1.msra.mxu0 0.0
        %1396 = vmatprep.subr.mxu0 0.0
        %1397 = vmatpush1.msra.mxu0 0.0
        %1398 = vmatprep.subr.mxu0 0.0
        %1399 = vmatpush1.msra.mxu0 0.0
        %1400 = vmatprep.subr.mxu0 0.0
        %1401 = vmatpush1.msra.mxu0 0.0
        %1402 = vmatprep.subr.mxu0 0.0
        %1403 = vmatpush1.msra.mxu0 0.0
        %1404 = vmatprep.subr.mxu0 0.0
        %1405 = vmatpush1.msra.mxu0 0.0
        %1406 = vmatprep.subr.mxu0 0.0
        %1407 = vmatpush1.msra.mxu0 0.0
        %1408 = vmatprep.subr.mxu0 0.0
        %1409 = vmatpush1.msra.mxu0 0.0
        %1410 = vmatprep.subr.mxu0 0.0
        %1411 = vmatpush1.msra.mxu0 0.0
        %1412 = vmatprep.subr.mxu0 0.0
        %1413 = vmatpush1.msra.mxu0 0.0
        %1414 = vmatprep.subr.mxu0 0.0
        %1415 = vmatpush1.msra.mxu0 0.0
        %1416 = vmatprep.subr.mxu0 0.0
        %1417 = vmatpush1.msra.mxu0 0.0
        %1418 = vmatprep.subr.mxu0 0.0
        %1419 = vmatpush1.msra.mxu0 0.0
        %1420 = vmatprep.subr.mxu0 0.0
        %1421 = vmatpush1.msra.mxu0 0.0
        %1422 = vmatprep.subr.mxu0 0.0
        %1423 = vmatpush1.msra.mxu0 0.0
        %1424 = vmatprep.subr.mxu0 0.0
        %1425 = vmatpush1.msra.mxu0 0.0
        %1426 = vmatprep.subr.mxu0 0.0
        %1427 = vmatpush1.msra.mxu0 0.0
        %1428 = vmatprep.subr.mxu0 0.0
        %1429 = vmatpush1.msra.mxu0 0.0
        %1430 = vmatprep.subr.mxu0 0.0
        %1431 = vmatpush1.msra.mxu0 0.0
        %1432 = vmatprep.subr.mxu0 0.0
        %1433 = vmatpush1.msra.mxu0 0.0
        %1434 = vmatprep.subr.mxu0 0.0
        %1435 = vmatpush1.msra.mxu0 0.0
        %1436 = vmatprep.subr.mxu0 0.0
        %1437 = vmatpush1.msra.mxu0 0.0
        %1438 = vmatprep.subr.mxu0 0.0
        %1439 = vmatpush1.msra.mxu0 0.0
        %1440 = vmatprep.subr.mxu0 0.0
        %1441 = vmatpush1.msra.mxu0 0.0
        %1442 = vmatprep.subr.mxu0 0.0
        %1443 = vmatpush1.msra.mxu0 0.0
        %1444 = vmatprep.subr.mxu0 0.0
        %1445 = vmatpush1.msra.mxu0 0.0
        %1446 = vmatprep.subr.mxu0 0.0
        %1447 = vmatpush1.msra.mxu0 0.0
        %1448 = vmatprep.subr.mxu0 0.0
        %1449 = vmatpush1.msra.mxu0 0.0
        %1450 = vmatprep.subr.mxu0 0.0
        %1451 = vmatpush1.msra.mxu0 0.0
        %1452 = vmatprep.subr.mxu0 0.0
        %1453 = vmatpush1.msra.mxu0 0.0
        %1454 = vmatprep.subr.mxu0 0.0
        %1455 = vmatpush1.msra.mxu0 0.0
        %1456 = vmatprep.mubr.f32.mxu0 0.0
        %1457 = vmatmul.mubr.f32.gmra.mrb[0].mxu0 %v1390
        %v1458 = vpop.f32.mrb[0].mxu0
        %v1459 = vadd.f32 0.0, %v1458
        %v1460 = vpop.f32.mrb[0].mxu0
        %1461 = vdwg.mxu0
        %1463 = vrot.lane.b32.xlu0 %v1113, 32
        %v1464 = vpop.permute.xlu0 %1463
        %1467 = vrot.lane.b32.xlu0 %v1286, 64
        %v1468 = vpop.permute.xlu0 %1467
        %1471 = vrot.lane.b32.xlu0 %v1459, 96
        %v1472 = vpop.permute.xlu0 %1471
        %v1474 = vsel %vm528, %v939, %v1464
        %vm1475 = vcmask 523264
        %v1476 = vsel %vm1475, %v1474, %v1468
        %vm1477 = vcmask 785408
        %v1478 = vsel %vm1477, %v1476, %v1472
        %v1479 = vld [vmem:[%s10] sm:$0xff]
        %v1480 = vld [vmem:[%s10 + $0x8] sm:$0xff]
        %v1481 = vld [vmem:[%s10 + $0x10] sm:$0xff]
        %v1482 = vld [vmem:[%s10 + $0x18] sm:$0xff]
        %v1483 = vld [vmem:[%s10 + $0x20] sm:$0xff]
        %v1484 = vld [vmem:[%s10 + $0x28] sm:$0xff]
        %v1485 = vld [vmem:[%s10 + $0x30] sm:$0xff]
        %v1486 = vld [vmem:[%s10 + $0x38] sm:$0xff]
        %v1487 = vld [vmem:[%s10 + $0x40] sm:$0xff]
        %v1488 = vld [vmem:[%s10 + $0x48] sm:$0xff]
        %v1489 = vld [vmem:[%s10 + $0x50] sm:$0xff]
        %v1490 = vld [vmem:[%s10 + $0x58] sm:$0xff]
        %v1491 = vld [vmem:[%s10 + $0x60] sm:$0xff]
        %v1492 = vld [vmem:[%s10 + $0x68] sm:$0xff]
        %v1493 = vld [vmem:[%s10 + $0x70] sm:$0xff]
        %v1494 = vld [vmem:[%s10 + $0x78] sm:$0xff]
        %1495 = vmatprep.subr.mxu0 0.0
        %1496 = vmatpush1.msra.mxu0 %v1479
        %1497 = vmatprep.subr.mxu0 0.0
        %1498 = vmatpush1.msra.mxu0 %v1480
        %1499 = vmatprep.subr.mxu0 0.0
        %1500 = vmatpush1.msra.mxu0 %v1481
        %1501 = vmatprep.subr.mxu0 0.0
        %1502 = vmatpush1.msra.mxu0 %v1482
        %1503 = vmatprep.subr.mxu0 0.0
        %1504 = vmatpush1.msra.mxu0 %v1483
        %1505 = vmatprep.subr.mxu0 0.0
        %1506 = vmatpush1.msra.mxu0 %v1484
        %1507 = vmatprep.subr.mxu0 0.0
        %1508 = vmatpush1.msra.mxu0 %v1485
        %1509 = vmatprep.subr.mxu0 0.0
        %1510 = vmatpush1.msra.mxu0 %v1486
        %1511 = vmatprep.subr.mxu0 0.0
        %1512 = vmatpush1.msra.mxu0 %v1487
        %1513 = vmatprep.subr.mxu0 0.0
        %1514 = vmatpush1.msra.mxu0 %v1488
        %1515 = vmatprep.subr.mxu0 0.0
        %1516 = vmatpush1.msra.mxu0 %v1489
        %1517 = vmatprep.subr.mxu0 0.0
        %1518 = vmatpush1.msra.mxu0 %v1490
        %1519 = vmatprep.subr.mxu0 0.0
        %1520 = vmatpush1.msra.mxu0 %v1491
        %1521 = vmatprep.subr.mxu0 0.0
        %1522 = vmatpush1.msra.mxu0 %v1492
        %1523 = vmatprep.subr.mxu0 0.0
        %1524 = vmatpush1.msra.mxu0 %v1493
        %1525 = vmatprep.subr.mxu0 0.0
        %1526 = vmatpush1.msra.mxu0 %v1494
        %1527 = vmatprep.subr.mxu0 0.0
        %1528 = vmatpush1.msra.mxu0 0.0
        %1529 = vmatprep.subr.mxu0 0.0
        %1530 = vmatpush1.msra.mxu0 0.0
        %1531 = vmatprep.subr.mxu0 0.0
        %1532 = vmatpush1.msra.mxu0 0.0
        %1533 = vmatprep.subr.mxu0 0.0
        %1534 = vmatpush1.msra.mxu0 0.0
        %1535 = vmatprep.subr.mxu0 0.0
        %1536 = vmatpush1.msra.mxu0 0.0
        %1537 = vmatprep.subr.mxu0 0.0
        %1538 = vmatpush1.msra.mxu0 0.0
        %1539 = vmatprep.subr.mxu0 0.0
        %1540 = vmatpush1.msra.mxu0 0.0
        %1541 = vmatprep.subr.mxu0 0.0
        %1542 = vmatpush1.msra.mxu0 0.0
        %1543 = vmatprep.subr.mxu0 0.0
        %1544 = vmatpush1.msra.mxu0 0.0
        %1545 = vmatprep.subr.mxu0 0.0
        %1546 = vmatpush1.msra.mxu0 0.0
        %1547 = vmatprep.subr.mxu0 0.0
        %1548 = vmatpush1.msra.mxu0 0.0
        %1549 = vmatprep.subr.mxu0 0.0
        %1550 = vmatpush1.msra.mxu0 0.0
        %1551 = vmatprep.subr.mxu0 0.0
        %1552 = vmatpush1.msra.mxu0 0.0
        %1553 = vmatprep.subr.mxu0 0.0
        %1554 = vmatpush1.msra.mxu0 0.0
        %1555 = vmatprep.subr.mxu0 0.0
        %1556 = vmatpush1.msra.mxu0 0.0
        %1557 = vmatprep.subr.mxu0 0.0
        %1558 = vmatpush1.msra.mxu0 0.0
        %1559 = vmatprep.mubr.f32.mxu0 0.0
        %1560 = vmatmul.mubr.f32.gmra.mrb[0].mxu0 %v1478
        %v1561 = vpop.f32.mrb[0].mxu0
        %v1562 = vadd.f32 0.0, %v1561
        %v1563 = vpop.f32.mrb[0].mxu0
        %1564 = vdwg.mxu0
        %v1565 = vadd.f32 %v514, %v1562
        %v1566 = vld [vmem:[%s11] sm:$0x1]
        %v1568 = vlaneseq
        %v1569 = vshrl.u32 %v1568, 7
        %v1570 = vsub.s32 0, %v1569
        %v1571 = vrot.slane %v1566, %v1570
        %v1573 = vadd.f32 %v1565, %v1571
        %v1574 = vsel %vm528, %v1573, 0.0
        %1575 = vadd.xlane.f32.xlu0 %v1574
        %v1576 = vpop.xlane.xlu0 %1575
        %v1577 = vrcp.pop 32.0
        %v1578 = vmul.f32 %v1576, %v1577
        %v1579 = vsub.f32 %v1573, %v1578
        %v1580 = vmul.f32 %v1579, %v1579
        %v1581 = vsel %vm528, %v1580, 0.0
        %1582 = vadd.xlane.f32.xlu0 %v1581
        %v1583 = vpop.xlane.xlu0 %1582
        %v1584 = vmul.f32 %v1583, %v1577
        %v1585 = vadd.f32 %v1584, 1e-05
        %v1586 = vrsqrt.pop %v1585
        %v1587 = vmul.f32 %v1579, %v1586
        %v1588 = vld [vmem:[%s12] sm:$0x1]
        %v1590 = vlaneseq
        %v1591 = vshrl.u32 %v1590, 7
        %v1592 = vsub.s32 0, %v1591
        %v1593 = vrot.slane %v1588, %v1592
        %v1595 = vmul.f32 %v1587, %v1593
        %v1596 = vld [vmem:[%s13] sm:$0x1]
        %v1598 = vlaneseq
        %v1599 = vshrl.u32 %v1598, 7
        %v1600 = vsub.s32 0, %v1599
        %v1601 = vrot.slane %v1596, %v1600
        %v1603 = vadd.f32 %v1595, %v1601
        %1604 = vst.msk [vmem:[%s497] sm:$0xff] %vm528, %v1603
        %s1605 = sand.u32 %s350, 1
        %s1606 = scalar_lea.sflag [#allocation3], %s1605
        %s1607 = sand.u32 %s350, 1
        %s1608 = smul.addr %s1607, 8
        %s1609 = scalar_lea.vmem [#allocation2], %s1608
        // Predicated region
        $region77: #{tpu_custom_call.1} parent=75 // pred_check
          %p1610 = pneg %p360
        $region78: #{tpu_custom_call.1} parent=75 // pred_check_branch
          %1612 = sbr.rel (%p1610) target = $region80
        $region79: #{tpu_custom_call.1} parent=75 // pred_region
          %s1614 = ssub.s32 128, 128
          %1615 = vsyncadd %s1606, %s1614
          %s1616 = smul.addr %s28, 128
          %s1617 = scalar_lea.hbm %s14, %s1616
          %s1619 = sshll.u32 %s1609, 4
          %s1620 = int_to_ptr.vmem [resolvable:$true] %s1619
          %1622 = dma.vmem_to_hbm [thread:$0]  %s1620, 128, %s1617, %s1606
        $region80: #{tpu_custom_call.1} parent=75 // pred_fallthru
          _
      $region76: #{tpu_custom_call.1} parent=5 // pred_fallthru
        _
      %p1623 = scmp.le.s32.totalorder 2, %s23
      // Predicated region
      $region81: #{tpu_custom_call.1} parent=5 // pred_check
        %p1624 = pneg %p1623
      $region82: #{tpu_custom_call.1} parent=5 // pred_check_branch
        %1626 = sbr.rel (%p1624) target = $region84
      $region83: #{tpu_custom_call.1} parent=5 // pred_region
        %s1627 = ssub.s32 %s23, 2
        // Predicated region
        $region85: #{tpu_custom_call.1} parent=83 // pred_check
          %p1628 = pneg %p366
        $region86: #{tpu_custom_call.1} parent=83 // pred_check_branch
          %1630 = sbr.rel (%p1628) target = $region88
        $region87: #{tpu_custom_call.1} parent=83 // pred_region
          %s1631 = sand.u32 %s351, 1
          %s1632 = scalar_lea.sflag [#allocation3], %s1631
          %s1633 = sand.u32 %s351, 1
          %s1634 = smul.addr %s1633, 8
          %s1635 = scalar_lea.vmem [#allocation2], %s1634
          %1636 = dma.done %s1632, 128
        $region88: #{tpu_custom_call.1} parent=83 // pred_fallthru
          _
      $region84: #{tpu_custom_call.1} parent=5 // pred_fallthru
        _
    $region6: #{tpu_custom_call.1} parent=1 // loop_footer
      %s27 = sadd.s32 1, %s23
    $region7: #{tpu_custom_call.1} parent=1 // loop_footer_branch
      %22 = sbr.rel target = $region3
    $region8: #{tpu_custom_call.1} parent=1 // loop_exit
      _
    %1637 = vsyncpa [#allocation3], 1
    %s1638 = scalar_lea.sflag [#allocation3], 1
    %1639 = vsyncpa %s1638, 1

</llo_original>
